<compile_context>
chip_gen: v7x
topology: tpu7x:2x2x1
jax: 0.10.0
libtpu: 0.0.40
codegen_flags: <defaults>
</compile_context>

<pallas_src>
import functools
import math

import jax
import jax.numpy as jnp
import numpy as np
from jax import lax
from jax.experimental import pallas as pl
from jax.experimental.pallas import tpu as pltpu


def _conv3x3_gelu_kernel(w_ref, b_ref, x_ref, o_ref, *, padded_w, approx_gelu):
    """In-VMEM im2col + 3x3 conv (9 accumulated MXU matmuls) + bias + GELU.

    w_ref: (9, Cout, Cin)        per-tap weights, tap t = dy*3 + dx     (VMEM, resident)
    b_ref: (Cout, 1)             conv bias                              (VMEM, resident)
    x_ref: (1, Cin, Hp*Wp + 2)   one image: spatially padded, rows flattened,
                                 plus a 1-element flat halo on each end (VMEM)
    o_ref: (1, Cout, H*Wp)       conv+GELU over (valid rows x padded cols), lane-dense
    """
    sq = o_ref.shape[2]                                  # H * Wp output positions (lanes)

    acc = None
    for t in range(9):
        dy, dx = divmod(t, 3)
        off = dy * padded_w + dx                         # static offset in [0, 2*Wp + 2]
        tap = x_ref[0, :, off:off + sq]                  # (Cin, Sq) shifted padded image
        part = lax.dot_general(
            w_ref[t], tap,
            dimension_numbers=(((1,), (0,)), ((), ())),
            preferred_element_type=jnp.float32,          # f32 accumulation on the MXU
        )                                                # (Cout, Sq)
        acc = part if acc is None else acc + part

    y = acc + b_ref[...].astype(jnp.float32)             # (Cout, 1) broadcast over lanes

    if approx_gelu:
        # tanh-approx GELU: transcendental goes to the otherwise-idle EUP slot.
        c = jnp.float32(math.sqrt(2.0 / math.pi))
        y = 0.5 * y * (1.0 + jnp.tanh(c * (y + jnp.float32(0.044715) * y * y * y)))
    else:
        # Exact GELU (PyTorch default): 0.5 * x * (1 + erf(x / sqrt(2))).
        y = 0.5 * y * (1.0 + lax.erf(y * jnp.float32(1.0 / math.sqrt(2.0))))

    o_ref[0] = y.astype(o_ref.dtype)


def conv3x3_gelu_pallas(x_nchw, weight, bias, *, mxu_bf16=False, approx_gelu=False):
    """Conv2d(k=3, pad=1) + GELU.  x:(N,Cin,H,W), weight:(Cout,Cin,3,3), bias:(Cout,).

    Returns (N, Cout, H, W).
    """
    N, Cin, H, W = x_nchw.shape
    Cout = weight.shape[0]
    Hp, Wp = H + 2, W + 2
    Sq = H * Wp                                  # output positions per image (lane axis)

    # ---- light wrapper glue: a single padded copy of x (no HBM im2col blow-up) ----
    x_pad = jnp.pad(x_nchw, ((0, 0), (0, 0), (1, 1), (1, 1)))            # (N,Cin,Hp,Wp)
    x_ext = jnp.pad(x_pad.reshape(N, Cin, Hp * Wp), ((0, 0), (0, 0), (1, 1)))

    # Per-tap weight matrices, tap-major: Wt[dy*3+dx, o, i] = weight[o, i, dy, dx].
    Wt = jnp.transpose(weight, (2, 3, 0, 1)).reshape(9, Cout, Cin)
    b2 = bias.reshape(Cout, 1).astype(jnp.float32)

    if mxu_bf16:
        # Cast in the wrapper so the dominant HBM reads are half-width too; the kernel
        # keeps f32 accumulation.  Opt-in: changes numerics ~1e-3 vs f32 PyTorch.
        x_ext = x_ext.astype(jnp.bfloat16)
        Wt = Wt.astype(jnp.bfloat16)

    kernel = functools.partial(_conv3x3_gelu_kernel, padded_w=Wp,
                               approx_gelu=approx_gelu)

    out = pl.pallas_call(
        kernel,
        out_shape=jax.ShapeDtypeStruct((N, Cout, Sq), x_nchw.dtype),
        grid_spec=pltpu.PrefetchScalarGridSpec(
            num_scalar_prefetch=0,
            grid=(N,),                                    # >= 2 steps at the test shape
            in_specs=[
                pl.BlockSpec((9, Cout, Cin), lambda n: (0, 0, 0)),    # weights resident
                pl.BlockSpec((Cout, 1), lambda n: (0, 0)),            # bias resident
                pl.BlockSpec((1, Cin, Hp * Wp + 2), lambda n: (n, 0, 0)),
            ],
            out_specs=pl.BlockSpec((1, Cout, Sq), lambda n: (n, 0, 0)),
        ),
        compiler_params=pltpu.CompilerParams(
            dimension_semantics=("parallel",),            # shards over v7x's 2 TCs
        ),
    )(Wt, b2, x_ext)

    # Drop the two padded columns per row -> (N, Cout, H, W).
    return out.reshape(N, Cout, H, Wp)[:, :, :, 1:W + 1]


def up_sample_wn_forward(x_nchw, weight, bias, factor, *, mxu_bf16=False,
                         approx_gelu=False):
    N, Cin, H, W = x_nchw.shape
    Cout = weight.shape[0]
    r = factor
    C = Cout // (r * r)

    y = conv3x3_gelu_pallas(x_nchw, weight, bias, mxu_bf16=mxu_bf16,
                            approx_gelu=approx_gelu)              # (N, Cout, H, W)

    # ---- XLA glue: PixelShuffle(factor) ----
    # TODO(synk): the fine-grained (i, j) -> lane interleave of PixelShuffle is an
    # intra-tile permutation not expressible with rectangular out_spec blocks; it stays
    # as a single fused reshape+transpose pass over the output.
    y = y.reshape(N, C, r, r, H, W)
    y = jnp.transpose(y, (0, 1, 4, 2, 5, 3))                      # (N, C, H, r, W, r)
    return y.reshape(N, C, H * r, W * r)


def _reference_forward(x_nchw, weight, bias, factor):
    """Pure-JAX reference (lax conv + exact GELU + pixel shuffle) for validation."""
    y = lax.conv_general_dilated(
        x_nchw.astype(jnp.float32), weight.astype(jnp.float32),
        window_strides=(1, 1), padding=((1, 1), (1, 1)),
        dimension_numbers=("NCHW", "OIHW", "NCHW"),
    ) + bias.astype(jnp.float32)[None, :, None, None]
    y = 0.5 * y * (1.0 + lax.erf(y / jnp.sqrt(jnp.float32(2.0))))
    N, Crr, H, W = y.shape
    r = factor
    C = Crr // (r * r)
    y = y.reshape(N, C, r, r, H, W)
    y = jnp.transpose(y, (0, 1, 4, 2, 5, 3))
    return y.reshape(N, C, H * r, W * r)


if __name__ == "__main__":
    # Small deterministic setup consistent with the module:
    # in_channel=4, rate=4, factor=2  (rate == factor**2 so PixelShuffle is valid)
    in_channel, rate, factor = 4, 4, 2
    N, H, W = 2, 16, 16
    Cout = in_channel * rate

    key = jax.random.PRNGKey(0)
    kx, kw, kb = jax.random.split(key, 3)
    x = jax.random.normal(kx, (N, in_channel, H, W), dtype=jnp.float32)
    # Deterministic "Conv2d"-style init (uniform, kaiming-like bound).
    fan_in = in_channel * 3 * 3
    bound = 1.0 / math.sqrt(fan_in)
    weight = jax.random.uniform(kw, (Cout, in_channel, 3, 3),
                                minval=-bound, maxval=bound, dtype=jnp.float32)
    bias = jax.random.uniform(kb, (Cout,), minval=-bound, maxval=bound,
                              dtype=jnp.float32)

    out = up_sample_wn_forward(x, weight, bias, factor)
    out = jax.block_until_ready(out)

    expected_shape = (N, in_channel * rate // (factor * factor), H * factor, W * factor)
    assert out.shape == expected_shape, (out.shape, expected_shape)

    ref = jax.block_until_ready(_reference_forward(x, weight, bias, factor))
    np.testing.assert_allclose(np.asarray(out), np.asarray(ref), rtol=1e-5, atol=2e-5)

    print("KERNEL_OK")
</pallas_src>

<mosaic_0001>
module attributes {stable_mosaic.version = 11 : i64} {
  func.func @_conv3x3_gelu_kernel(%arg0: i32, %arg1: memref<9x16x4xf32, #tpu.memory_space<vmem>>, %arg2: memref<16x1xf32, #tpu.memory_space<vmem>>, %arg3: memref<1x4x326xf32, #tpu.memory_space<vmem>>, %arg4: memref<1x16x288xf32, #tpu.memory_space<vmem>>) attributes {dimension_semantics = [#tpu.dimension_semantics<parallel>], iteration_bounds = array<i64: 2>, scalar_prefetch = 0 : i64, scratch_operands = 0 : i64, tpu.core_type = #tpu.core_type<tc>, window_params = [{pipeline_mode = #tpu.pipeline_mode<synchronous>, transform_indices = @transform_0, window_bounds = array<i64: 9, 16, 4>}, {pipeline_mode = #tpu.pipeline_mode<synchronous>, transform_indices = @transform_1, window_bounds = array<i64: 16, 1>}, {transform_indices = @transform_2, window_bounds = array<i64: 1, 4, 326>}, {transform_indices = @transform_3, window_bounds = array<i64: 1, 16, 288>}]} {
    %c0 = arith.constant 0 : index
    %c0_0 = arith.constant 0 : index
    %c0_1 = arith.constant 0 : index
    %0 = vector.load %arg3[%c0, %c0_0, %c0_1] : memref<1x4x326xf32, #tpu.memory_space<vmem>>, vector<1x4x288xf32>
    %1 = vector.shape_cast %0 : vector<1x4x288xf32> to vector<4x288xf32>
    %c0_2 = arith.constant 0 : index
    %c0_3 = arith.constant 0 : index
    %c0_4 = arith.constant 0 : index
    %2 = vector.load %arg1[%c0_2, %c0_3, %c0_4] : memref<9x16x4xf32, #tpu.memory_space<vmem>>, vector<1x16x4xf32>
    %3 = vector.shape_cast %2 : vector<1x16x4xf32> to vector<16x4xf32>
    %cst = arith.constant dense<0.000000e+00> : vector<16x288xf32>
    %4 = tpu.matmul %3, %1, %cst {dimension_numbers = #tpu.dot_dimension_numbers<[1], [0], [0], [1], [0, 0, 1, 1], [], []>} : vector<16x4xf32>, vector<4x288xf32>, vector<16x288xf32> -> vector<16x288xf32>
    %c0_5 = arith.constant 0 : index
    %c0_6 = arith.constant 0 : index
    %c1 = arith.constant 1 : index
    %5 = vector.load %arg3[%c0_5, %c0_6, %c1] : memref<1x4x326xf32, #tpu.memory_space<vmem>>, vector<1x4x288xf32>
    %6 = vector.shape_cast %5 : vector<1x4x288xf32> to vector<4x288xf32>
    %c1_7 = arith.constant 1 : index
    %c0_8 = arith.constant 0 : index
    %c0_9 = arith.constant 0 : index
    %7 = vector.load %arg1[%c1_7, %c0_8, %c0_9] : memref<9x16x4xf32, #tpu.memory_space<vmem>>, vector<1x16x4xf32>
    %8 = vector.shape_cast %7 : vector<1x16x4xf32> to vector<16x4xf32>
    %cst_10 = arith.constant dense<0.000000e+00> : vector<16x288xf32>
    %9 = tpu.matmul %8, %6, %cst_10 {dimension_numbers = #tpu.dot_dimension_numbers<[1], [0], [0], [1], [0, 0, 1, 1], [], []>} : vector<16x4xf32>, vector<4x288xf32>, vector<16x288xf32> -> vector<16x288xf32>
    %10 = arith.addf %4, %9 : vector<16x288xf32>
    %c0_11 = arith.constant 0 : index
    %c0_12 = arith.constant 0 : index
    %c2 = arith.constant 2 : index
    %11 = vector.load %arg3[%c0_11, %c0_12, %c2] : memref<1x4x326xf32, #tpu.memory_space<vmem>>, vector<1x4x288xf32>
    %12 = vector.shape_cast %11 : vector<1x4x288xf32> to vector<4x288xf32>
    %c2_13 = arith.constant 2 : index
    %c0_14 = arith.constant 0 : index
    %c0_15 = arith.constant 0 : index
    %13 = vector.load %arg1[%c2_13, %c0_14, %c0_15] : memref<9x16x4xf32, #tpu.memory_space<vmem>>, vector<1x16x4xf32>
    %14 = vector.shape_cast %13 : vector<1x16x4xf32> to vector<16x4xf32>
    %cst_16 = arith.constant dense<0.000000e+00> : vector<16x288xf32>
    %15 = tpu.matmul %14, %12, %cst_16 {dimension_numbers = #tpu.dot_dimension_numbers<[1], [0], [0], [1], [0, 0, 1, 1], [], []>} : vector<16x4xf32>, vector<4x288xf32>, vector<16x288xf32> -> vector<16x288xf32>
    %16 = arith.addf %10, %15 : vector<16x288xf32>
    %c0_17 = arith.constant 0 : index
    %c0_18 = arith.constant 0 : index
    %c18 = arith.constant 18 : index
    %17 = vector.load %arg3[%c0_17, %c0_18, %c18] : memref<1x4x326xf32, #tpu.memory_space<vmem>>, vector<1x4x288xf32>
    %18 = vector.shape_cast %17 : vector<1x4x288xf32> to vector<4x288xf32>
    %c3 = arith.constant 3 : index
    %c0_19 = arith.constant 0 : index
    %c0_20 = arith.constant 0 : index
    %19 = vector.load %arg1[%c3, %c0_19, %c0_20] : memref<9x16x4xf32, #tpu.memory_space<vmem>>, vector<1x16x4xf32>
    %20 = vector.shape_cast %19 : vector<1x16x4xf32> to vector<16x4xf32>
    %cst_21 = arith.constant dense<0.000000e+00> : vector<16x288xf32>
    %21 = tpu.matmul %20, %18, %cst_21 {dimension_numbers = #tpu.dot_dimension_numbers<[1], [0], [0], [1], [0, 0, 1, 1], [], []>} : vector<16x4xf32>, vector<4x288xf32>, vector<16x288xf32> -> vector<16x288xf32>
    %22 = arith.addf %16, %21 : vector<16x288xf32>
    %c0_22 = arith.constant 0 : index
    %c0_23 = arith.constant 0 : index
    %c19 = arith.constant 19 : index
    %23 = vector.load %arg3[%c0_22, %c0_23, %c19] : memref<1x4x326xf32, #tpu.memory_space<vmem>>, vector<1x4x288xf32>
    %24 = vector.shape_cast %23 : vector<1x4x288xf32> to vector<4x288xf32>
    %c4 = arith.constant 4 : index
    %c0_24 = arith.constant 0 : index
    %c0_25 = arith.constant 0 : index
    %25 = vector.load %arg1[%c4, %c0_24, %c0_25] : memref<9x16x4xf32, #tpu.memory_space<vmem>>, vector<1x16x4xf32>
    %26 = vector.shape_cast %25 : vector<1x16x4xf32> to vector<16x4xf32>
    %cst_26 = arith.constant dense<0.000000e+00> : vector<16x288xf32>
    %27 = tpu.matmul %26, %24, %cst_26 {dimension_numbers = #tpu.dot_dimension_numbers<[1], [0], [0], [1], [0, 0, 1, 1], [], []>} : vector<16x4xf32>, vector<4x288xf32>, vector<16x288xf32> -> vector<16x288xf32>
    %28 = arith.addf %22, %27 : vector<16x288xf32>
    %c0_27 = arith.constant 0 : index
    %c0_28 = arith.constant 0 : index
    %c20 = arith.constant 20 : index
    %29 = vector.load %arg3[%c0_27, %c0_28, %c20] : memref<1x4x326xf32, #tpu.memory_space<vmem>>, vector<1x4x288xf32>
    %30 = vector.shape_cast %29 : vector<1x4x288xf32> to vector<4x288xf32>
    %c5 = arith.constant 5 : index
    %c0_29 = arith.constant 0 : index
    %c0_30 = arith.constant 0 : index
    %31 = vector.load %arg1[%c5, %c0_29, %c0_30] : memref<9x16x4xf32, #tpu.memory_space<vmem>>, vector<1x16x4xf32>
    %32 = vector.shape_cast %31 : vector<1x16x4xf32> to vector<16x4xf32>
    %cst_31 = arith.constant dense<0.000000e+00> : vector<16x288xf32>
    %33 = tpu.matmul %32, %30, %cst_31 {dimension_numbers = #tpu.dot_dimension_numbers<[1], [0], [0], [1], [0, 0, 1, 1], [], []>} : vector<16x4xf32>, vector<4x288xf32>, vector<16x288xf32> -> vector<16x288xf32>
    %34 = arith.addf %28, %33 : vector<16x288xf32>
    %c0_32 = arith.constant 0 : index
    %c0_33 = arith.constant 0 : index
    %c36 = arith.constant 36 : index
    %35 = vector.load %arg3[%c0_32, %c0_33, %c36] : memref<1x4x326xf32, #tpu.memory_space<vmem>>, vector<1x4x288xf32>
    %36 = vector.shape_cast %35 : vector<1x4x288xf32> to vector<4x288xf32>
    %c6 = arith.constant 6 : index
    %c0_34 = arith.constant 0 : index
    %c0_35 = arith.constant 0 : index
    %37 = vector.load %arg1[%c6, %c0_34, %c0_35] : memref<9x16x4xf32, #tpu.memory_space<vmem>>, vector<1x16x4xf32>
    %38 = vector.shape_cast %37 : vector<1x16x4xf32> to vector<16x4xf32>
    %cst_36 = arith.constant dense<0.000000e+00> : vector<16x288xf32>
    %39 = tpu.matmul %38, %36, %cst_36 {dimension_numbers = #tpu.dot_dimension_numbers<[1], [0], [0], [1], [0, 0, 1, 1], [], []>} : vector<16x4xf32>, vector<4x288xf32>, vector<16x288xf32> -> vector<16x288xf32>
    %40 = arith.addf %34, %39 : vector<16x288xf32>
    %c0_37 = arith.constant 0 : index
    %c0_38 = arith.constant 0 : index
    %c37 = arith.constant 37 : index
    %41 = vector.load %arg3[%c0_37, %c0_38, %c37] : memref<1x4x326xf32, #tpu.memory_space<vmem>>, vector<1x4x288xf32>
    %42 = vector.shape_cast %41 : vector<1x4x288xf32> to vector<4x288xf32>
    %c7 = arith.constant 7 : index
    %c0_39 = arith.constant 0 : index
    %c0_40 = arith.constant 0 : index
    %43 = vector.load %arg1[%c7, %c0_39, %c0_40] : memref<9x16x4xf32, #tpu.memory_space<vmem>>, vector<1x16x4xf32>
    %44 = vector.shape_cast %43 : vector<1x16x4xf32> to vector<16x4xf32>
    %cst_41 = arith.constant dense<0.000000e+00> : vector<16x288xf32>
    %45 = tpu.matmul %44, %42, %cst_41 {dimension_numbers = #tpu.dot_dimension_numbers<[1], [0], [0], [1], [0, 0, 1, 1], [], []>} : vector<16x4xf32>, vector<4x288xf32>, vector<16x288xf32> -> vector<16x288xf32>
    %46 = arith.addf %40, %45 : vector<16x288xf32>
    %c0_42 = arith.constant 0 : index
    %c0_43 = arith.constant 0 : index
    %c38 = arith.constant 38 : index
    %47 = vector.load %arg3[%c0_42, %c0_43, %c38] : memref<1x4x326xf32, #tpu.memory_space<vmem>>, vector<1x4x288xf32>
    %48 = vector.shape_cast %47 : vector<1x4x288xf32> to vector<4x288xf32>
    %c8 = arith.constant 8 : index
    %c0_44 = arith.constant 0 : index
    %c0_45 = arith.constant 0 : index
    %49 = vector.load %arg1[%c8, %c0_44, %c0_45] : memref<9x16x4xf32, #tpu.memory_space<vmem>>, vector<1x16x4xf32>
    %50 = vector.shape_cast %49 : vector<1x16x4xf32> to vector<16x4xf32>
    %cst_46 = arith.constant dense<0.000000e+00> : vector<16x288xf32>
    %51 = tpu.matmul %50, %48, %cst_46 {dimension_numbers = #tpu.dot_dimension_numbers<[1], [0], [0], [1], [0, 0, 1, 1], [], []>} : vector<16x4xf32>, vector<4x288xf32>, vector<16x288xf32> -> vector<16x288xf32>
    %52 = arith.addf %46, %51 : vector<16x288xf32>
    %c0_47 = arith.constant 0 : index
    %c0_48 = arith.constant 0 : index
    %53 = vector.load %arg2[%c0_47, %c0_48] : memref<16x1xf32, #tpu.memory_space<vmem>>, vector<16x1xf32>
    %54 = vector.broadcast %53 : vector<16x1xf32> to vector<16x288xf32>
    %55 = arith.addf %52, %54 : vector<16x288xf32>
    %cst_49 = arith.constant 5.000000e-01 : f32
    %56 = vector.broadcast %cst_49 : f32 to vector<16x288xf32>
    %57 = arith.mulf %56, %55 : vector<16x288xf32>
    %cst_50 = arith.constant 0.707106769 : f32
    %58 = vector.broadcast %cst_50 : f32 to vector<16x288xf32>
    %59 = arith.mulf %55, %58 : vector<16x288xf32>
    %60 = math.erf %59 : vector<16x288xf32>
    %cst_51 = arith.constant 1.000000e+00 : f32
    %61 = vector.broadcast %cst_51 : f32 to vector<16x288xf32>
    %62 = arith.addf %61, %60 : vector<16x288xf32>
    %63 = arith.mulf %57, %62 : vector<16x288xf32>
    %c0_52 = arith.constant 0 : index
    %c0_53 = arith.constant 0 : index
    %c0_54 = arith.constant 0 : index
    %64 = vector.load %arg4[%c0_52, %c0_53, %c0_54] : memref<1x16x288xf32, #tpu.memory_space<vmem>>, vector<1x16x288xf32>
    %65 = vector.shape_cast %64 : vector<1x16x288xf32> to vector<16x288xf32>
    %66 = vector.shape_cast %63 : vector<16x288xf32> to vector<1x16x288xf32>
    tpu.vector_store %arg4[%c0_52, %c0_53, %c0_54], %66 {strides = array<i32>} : memref<1x16x288xf32, #tpu.memory_space<vmem>>, vector<1x16x288xf32>,
    return
  }
  func.func @transform_0(%arg0: i32) -> (i32, i32, i32) {
    %c0_i32 = arith.constant 0 : i32
    %c0_i32_0 = arith.constant 0 : i32
    %c0_i32_1 = arith.constant 0 : i32
    %c0_i32_2 = arith.constant 0 : i32
    return %c0_i32, %c0_i32_0, %c0_i32_1 : i32, i32, i32
  }
  func.func @transform_1(%arg0: i32) -> (i32, i32) {
    %c0_i32 = arith.constant 0 : i32
    %c0_i32_0 = arith.constant 0 : i32
    %c0_i32_1 = arith.constant 0 : i32
    return %c0_i32, %c0_i32_0 : i32, i32
  }
  func.func @transform_2(%arg0: i32) -> (i32, i32, i32) {
    %c0_i32 = arith.constant 0 : i32
    %c0_i32_0 = arith.constant 0 : i32
    %c0_i32_1 = arith.constant 0 : i32
    return %arg0, %c0_i32, %c0_i32_0 : i32, i32, i32
  }
  func.func @transform_3(%arg0: i32) -> (i32, i32, i32) {
    %c0_i32 = arith.constant 0 : i32
    %c0_i32_0 = arith.constant 0 : i32
    %c0_i32_1 = arith.constant 0 : i32
    return %arg0, %c0_i32, %c0_i32_0 : i32, i32, i32
  }
}

</mosaic_0001>

<llo_original>
// kernel: tpu_custom_call.1
$region0: #{tpu_custom_call.1}
  #allocation0 [shape = 'u32[]', space=smem, size = 0x4, offset = 0x4, fixed_abs, tag = 'smem constant byte address 0x4 - core index']
  #allocation1 [shape = 'u32[144,128]{1,0:T(1,128)}', space=vmem, size = 0x12000, scoped, tag = 'internal scratch']
  %s0 = inlined_call_operand.vmem [shape: f32[9,16,4], index: 0, kind: input, shape index: {}]
  %s1 = inlined_call_operand.vmem [shape: f32[16,1], index: 1, kind: input, shape index: {}]
  %s2 = inlined_call_operand.vmem [shape: f32[2,4,326], index: 2, kind: input, shape index: {}]
  %s3 = inlined_call_operand.hbm [shape: f32[2,16,288], index: 3, kind: output, shape index: {}]
  %s4 = sld [smem:[#allocation0]]
  $region45: #{tpu_custom_call.1} parent=0
    _
  %s6 = ssub.s32 1, %s4
  %s7 = scalar_select 0, %s6, %s4
  $region1: #{tpu_custom_call.1} parent=0
    #allocation2 [shape = 'u8[49152]{0}', space=vmem, size = 0xc000, scoped, tag = 'output window, operand 0']
    #allocation3 [shape = 's32[2]{0}', space=sflag, size = 0x8, scoped, tag = 'scoped memory for tpu_custom_call.1']
    %8 = vsyncpa [#allocation3], 0
    %s9 = scalar_lea.sflag [#allocation3], 1
    %10 = vsyncpa %s9, 0
    loop: start=0, step=1, limit=4
    $region2: #{tpu_custom_call.1} parent=1 // loop_pre_header
      _
    $region3: #{tpu_custom_call.1} parent=1 // loop_header
      %s12 = sphi 0, %s16
      %p13 = scmp.ge.s32.totalorder %s12, 4
      %s20 = sphi 0, %s20
      %s22 = sphi 0, %s20
      %s23 = sphi 0, %s22
      %s37 = sphi 0, %s23
      %s41 = sphi 0, %s41
      %s43 = sphi 0, %s41
      %s44 = sphi 0, %s43
      %s58 = sphi 0, %s44
      %s64 = sphi 0, %s66
      %s67 = sphi 0, %s64
      %s68 = sphi 0, %s67
      %s84 = sphi 0, %s68
      %s90 = sphi 0, %s92
      %s93 = sphi 0, %s90
      %s94 = sphi 0, %s93
      %s110 = sphi 0, %s94
    $region4: #{tpu_custom_call.1} parent=1 // loop_header_branch
      %15 = sbr.rel (%p13) target = $region8
    $region5: #{tpu_custom_call.1} parent=1 // loop_body
      %s17 = ssub.s32 %s12, 1
      %s18 = ssub.s32 %s12, 2
      %s19 = sadd.s32 %s12, 1
      %s21 = sadd.s32 %s20, 1
      %p24 = scmp.eq.s32.totalorder %s12, 1
      %p25 = scmp.ne.s32.totalorder %s20, %s22
      %p26 = scmp.eq.s32.totalorder %s12, 0
      %p27 = por %p25, %p26
      %p28 = scmp.ne.s32.totalorder %s20, %s22
      %p29 = scmp.eq.s32.totalorder %s17, 1
      %p30 = por %p28, %p29
      %p31 = scmp.ne.s32.totalorder %s22, %s23
      %p32 = scmp.eq.s32.totalorder %s17, 0
      %p33 = por %p31, %p32
      %p34 = scmp.ne.s32.totalorder %s22, %s23
      %p35 = scmp.eq.s32.totalorder %s18, 1
      %p36 = por %p34, %p35
      %p38 = scmp.ne.s32.totalorder %s23, %s37
      %p39 = scmp.eq.s32.totalorder %s18, 0
      %p40 = por %p38, %p39
      %s42 = sadd.s32 %s41, 1
      %p45 = scmp.eq.s32.totalorder %s12, 1
      %p46 = scmp.ne.s32.totalorder %s41, %s43
      %p47 = scmp.eq.s32.totalorder %s12, 0
      %p48 = por %p46, %p47
      %p49 = scmp.ne.s32.totalorder %s41, %s43
      %p50 = scmp.eq.s32.totalorder %s17, 1
      %p51 = por %p49, %p50
      %p52 = scmp.ne.s32.totalorder %s43, %s44
      %p53 = scmp.eq.s32.totalorder %s17, 0
      %p54 = por %p52, %p53
      %p55 = scmp.ne.s32.totalorder %s43, %s44
      %p56 = scmp.eq.s32.totalorder %s18, 1
      %p57 = por %p55, %p56
      %p59 = scmp.ne.s32.totalorder %s44, %s58
      %p60 = scmp.eq.s32.totalorder %s18, 0
      %p61 = por %p59, %p60
      %s62 = ssub.s32 %s12, %s19
      %p63 = scmp.eq.s32.totalorder %s62, 0
      %s65 = sadd.s32 %s64, 1
      %s66 = scalar_select %p63, %s64, %s65
      %p69 = pneg %p63
      %p70 = scmp.eq.s32.totalorder %s12, 1
      %p71 = por %p69, %p70
      %p72 = scmp.ne.s32.totalorder %s64, %s67
      %p73 = scmp.eq.s32.totalorder %s12, 0
      %p74 = por %p72, %p73
      %p75 = scmp.ne.s32.totalorder %s64, %s67
      %p76 = scmp.eq.s32.totalorder %s17, 1
      %p77 = por %p75, %p76
      %p78 = scmp.ne.s32.totalorder %s67, %s68
      %p79 = scmp.eq.s32.totalorder %s17, 0
      %p80 = por %p78, %p79
      %p81 = scmp.ne.s32.totalorder %s67, %s68
      %p82 = scmp.eq.s32.totalorder %s18, 1
      %p83 = por %p81, %p82
      %p85 = scmp.ne.s32.totalorder %s68, %s84
      %p86 = scmp.eq.s32.totalorder %s18, 0
      %p87 = por %p85, %p86
      %s88 = ssub.s32 %s12, %s19
      %p89 = scmp.eq.s32.totalorder %s88, 0
      %s91 = sadd.s32 %s90, 1
      %s92 = scalar_select %p89, %s90, %s91
      %p95 = pneg %p89
      %p96 = scmp.eq.s32.totalorder %s12, 1
      %p97 = por %p95, %p96
      %p98 = scmp.ne.s32.totalorder %s90, %s93
      %p99 = scmp.eq.s32.totalorder %s12, 0
      %p100 = por %p98, %p99
      %p101 = scmp.ne.s32.totalorder %s90, %s93
      %p102 = scmp.eq.s32.totalorder %s17, 1
      %p103 = por %p101, %p102
      %p104 = scmp.ne.s32.totalorder %s93, %s94
      %p105 = scmp.eq.s32.totalorder %s17, 0
      %p106 = por %p104, %p105
      %p107 = scmp.ne.s32.totalorder %s93, %s94
      %p108 = scmp.eq.s32.totalorder %s18, 1
      %p109 = por %p107, %p108
      %p111 = scmp.ne.s32.totalorder %s94, %s110
      %p112 = scmp.eq.s32.totalorder %s18, 0
      %p113 = por %p111, %p112
      %p114 = scmp.le.s32.totalorder 1, %s12
      %p115 = scmp.lt.s32.totalorder %s12, 3
      %p116 = pnand %p114, %p115
      %p117 = pneg %p116
      // Predicated region
      $region9: #{tpu_custom_call.1} parent=5 // pred_check
        _
      $region10: #{tpu_custom_call.1} parent=5 // pred_check_branch
        %119 = sbr.rel (%p116) target = $region12
      $region11: #{tpu_custom_call.1} parent=5 // pred_region
        %s120 = ssub.s32 %s12, 1
        // Predicated region
        $region13: #{tpu_custom_call.1} parent=11 // pred_check
          %p121 = pneg %p33
        $region14: #{tpu_custom_call.1} parent=11 // pred_check_branch
          %123 = sbr.rel (%p121) target = $region16
        $region15: #{tpu_custom_call.1} parent=11 // pred_region
          _
        $region16: #{tpu_custom_call.1} parent=11 // pred_fallthru
          _
        // Predicated region
        $region17: #{tpu_custom_call.1} parent=11 // pred_check
          %p124 = pneg %p54
        $region18: #{tpu_custom_call.1} parent=11 // pred_check_branch
          %126 = sbr.rel (%p124) target = $region20
        $region19: #{tpu_custom_call.1} parent=11 // pred_region
          _
        $region20: #{tpu_custom_call.1} parent=11 // pred_fallthru
          _
      $region12: #{tpu_custom_call.1} parent=5 // pred_fallthru
        _
      %p127 = scmp.lt.s32.totalorder %s12, 2
      // Predicated region
      $region21: #{tpu_custom_call.1} parent=5 // pred_check
        %p128 = pneg %p127
      $region22: #{tpu_custom_call.1} parent=5 // pred_check_branch
        %130 = sbr.rel (%p128) target = $region24
      $region23: #{tpu_custom_call.1} parent=5 // pred_region
        // Predicated region
        $region25: #{tpu_custom_call.1} parent=23 // pred_check
          %p131 = pneg %p74
        $region26: #{tpu_custom_call.1} parent=23 // pred_check_branch
          %133 = sbr.rel (%p131) target = $region28
        $region27: #{tpu_custom_call.1} parent=23 // pred_region
          %p134 = scmp.lt.s32.totalorder %s12, 1
          %s135 = scalar_select %p134, %s12, 1
          %s136 = smul.addr %s135, 3
          %s137 = smul.addr %s136, 4
          %s138 = scalar_lea.vmem %s2, %s137
        $region28: #{tpu_custom_call.1} parent=23 // pred_fallthru
          _
      $region24: #{tpu_custom_call.1} parent=5 // pred_fallthru
        _
      %p139 = scmp.le.s32.totalorder 1, %s12
      %p140 = scmp.lt.s32.totalorder %s12, 3
      %p141 = pnand %p139, %p140
      %p142 = pneg %p141
      // Predicated region
      $region29: #{tpu_custom_call.1} parent=5 // pred_check
        _
      $region30: #{tpu_custom_call.1} parent=5 // pred_check_branch
        %144 = sbr.rel (%p141) target = $region32
      $region31: #{tpu_custom_call.1} parent=5 // pred_region
        %s145 = ssub.s32 %s12, 1
        %p146 = pneg %p33
        %p147 = pneg %p30
        %p148 = pneg %p54
        %p149 = pneg %p51
        %p150 = scmp.lt.s32.totalorder %s17, 1
        %s151 = scalar_select %p150, %s17, 1
        %s152 = smul.addr %s151, 3
        %s153 = smul.addr %s152, 4
        %s154 = scalar_lea.vmem %s2, %s153
        %p155 = pneg %p80
        %p156 = pneg %p77
        %p157 = pneg %p106
        %p158 = pneg %p103
        %s159 = sand.u32 %s93, 1
        %s160 = scalar_lea.sflag [#allocation3], %s159
        %s161 = sand.u32 %s93, 1
        %s162 = smul.addr %s161, 48
        %s163 = scalar_lea.vmem [#allocation2], %s162
        %p164 = scmp.lt.s32.totalorder %s17, 1
        %s165 = scalar_select %p164, %s17, 1
        %s166 = smul.addr %s165, 3
        %s167 = smul.addr %s166, 4
        %s168 = scalar_lea.vmem %s2, %s167
        %v169 = vld [vmem:[%s168] sm:$0xff]
        %v170 = vld [vmem:[%s168 + $0x8] sm:$0xf]
        %v171 = vld [vmem:[%s0] sm:$0xff]
        %v172 = vld [vmem:[%s0 + $0x8] sm:$0xff]
        %s173 = scalar_lea.vmem %s0, 16
        %v174 = vld [vmem:[%s173] sm:$0xff]
        %v175 = vld [vmem:[%s173 + $0x8] sm:$0xff]
        %v178 = vcombine.high %v169, %v169
        %179 = vrot.lane.b32.xlu0 %v169, 127
        %v180 = vpop.permute.xlu0 %179
        %181 = vrot.lane.b32.xlu0 %v178, 127
        %v182 = vpop.permute.xlu0 %181
        %183 = vrot.lane.b32.xlu0 %v170, 127
        %v184 = vpop.permute.xlu0 %183
        %vm185 = vcmask 1039360
        %v186 = vsel %vm185, %v180, %v182
        %v187 = vsel %vm185, %v182, %v184
        %vm188 = vcmask 31744
        %v190 = vsel %vm188, %v174, 0
        %v193 = vsel %vm188, %v175, 0
        %vm195 = vcmask 1043456
        %v196 = vsel %vm195, %v186, 0
        %v198 = vsel %vm195, %v187, 0
        %v200 = vsel %vm195, %v184, 0
        %202 = vmatprep.subr.mxu0 %v198
        %203 = vmatpush1.msra.mxu0 %v196
        %204 = vmatprep.subr.mxu0 0.0
        %205 = vmatpush1.msra.mxu0 0.0
        %206 = vmatprep.subr.mxu0 0.0
        %207 = vmatpush1.msra.mxu0 0.0
        %208 = vmatprep.subr.mxu0 0.0
        %209 = vmatpush1.msra.mxu0 0.0
        %210 = vmatprep.subr.mxu0 0.0
        %211 = vmatpush1.msra.mxu0 0.0
        %212 = vmatprep.subr.mxu0 0.0
        %213 = vmatpush1.msra.mxu0 0.0
        %214 = vmatprep.subr.mxu0 0.0
        %215 = vmatpush1.msra.mxu0 0.0
        %216 = vmatprep.subr.mxu0 0.0
        %217 = vmatpush1.msra.mxu0 0.0
        %218 = vmatprep.subr.mxu0 0.0
        %219 = vmatpush1.msra.mxu0 0.0
        %220 = vmatprep.subr.mxu0 0.0
        %221 = vmatpush1.msra.mxu0 0.0
        %222 = vmatprep.subr.mxu0 0.0
        %223 = vmatpush1.msra.mxu0 0.0
        %224 = vmatprep.subr.mxu0 0.0
        %225 = vmatpush1.msra.mxu0 0.0
        %226 = vmatprep.subr.mxu0 0.0
        %227 = vmatpush1.msra.mxu0 0.0
        %228 = vmatprep.subr.mxu0 0.0
        %229 = vmatpush1.msra.mxu0 0.0
        %230 = vmatprep.subr.mxu0 0.0
        %231 = vmatpush1.msra.mxu0 0.0
        %232 = vmatprep.subr.mxu0 0.0
        %233 = vmatpush1.msra.mxu0 0.0
        %234 = vmatprep.subr.mxu0 0.0
        %235 = vmatpush1.msra.mxu0 0.0
        %236 = vmatprep.subr.mxu0 0.0
        %237 = vmatpush1.msra.mxu0 0.0
        %238 = vmatprep.subr.mxu0 0.0
        %239 = vmatpush1.msra.mxu0 0.0
        %240 = vmatprep.subr.mxu0 0.0
        %241 = vmatpush1.msra.mxu0 0.0
        %242 = vmatprep.subr.mxu0 0.0
        %243 = vmatpush1.msra.mxu0 0.0
        %244 = vmatprep.subr.mxu0 0.0
        %245 = vmatpush1.msra.mxu0 0.0
        %246 = vmatprep.subr.mxu0 0.0
        %247 = vmatpush1.msra.mxu0 0.0
        %248 = vmatprep.subr.mxu0 0.0
        %249 = vmatpush1.msra.mxu0 0.0
        %250 = vmatprep.subr.mxu0 0.0
        %251 = vmatpush1.msra.mxu0 0.0
        %252 = vmatprep.subr.mxu0 0.0
        %253 = vmatpush1.msra.mxu0 0.0
        %254 = vmatprep.subr.mxu0 0.0
        %255 = vmatpush1.msra.mxu0 0.0
        %256 = vmatprep.subr.mxu0 0.0
        %257 = vmatpush1.msra.mxu0 0.0
        %258 = vmatprep.subr.mxu0 0.0
        %259 = vmatpush1.msra.mxu0 0.0
        %260 = vmatprep.subr.mxu0 0.0
        %261 = vmatpush1.msra.mxu0 0.0
        %262 = vmatprep.subr.mxu0 0.0
        %263 = vmatpush1.msra.mxu0 0.0
        %264 = vmatprep.subr.mxu0 0.0
        %265 = vmatpush1.msra.mxu0 0.0
        %266 = vmatprep.mubr.f32.mxu0 0.0
        %267 = vmatmul.mubr.f32.gmra.mrb[0].mxu0 %v190
        %v268 = vpop.f32.mrb[0].mxu0
        %v269 = vadd.f32 0.0, %v268
        %v270 = vpop.f32.mrb[0].mxu0
        %v271 = vadd.f32 0.0, %v270
        %272 = vmatprep.mubr.f32.mxu0 0.0
        %273 = vmatmul.mubr.f32.gmra.mrb[0].mxu0 %v193
        %v274 = vpop.f32.mrb[0].mxu0
        %v275 = vadd.f32 0.0, %v274
        %v276 = vpop.f32.mrb[0].mxu0
        %v277 = vadd.f32 0.0, %v276
        %278 = vdwg.mxu0
        %279 = vmatprep.subr.mxu0 0.0
        %280 = vmatpush1.msra.mxu0 %v200
        %281 = vmatprep.subr.mxu0 0.0
        %282 = vmatpush1.msra.mxu0 0.0
        %283 = vmatprep.subr.mxu0 0.0
        %284 = vmatpush1.msra.mxu0 0.0
        %285 = vmatprep.subr.mxu0 0.0
        %286 = vmatpush1.msra.mxu0 0.0
        %287 = vmatprep.subr.mxu0 0.0
        %288 = vmatpush1.msra.mxu0 0.0
        %289 = vmatprep.subr.mxu0 0.0
        %290 = vmatpush1.msra.mxu0 0.0
        %291 = vmatprep.subr.mxu0 0.0
        %292 = vmatpush1.msra.mxu0 0.0
        %293 = vmatprep.subr.mxu0 0.0
        %294 = vmatpush1.msra.mxu0 0.0
        %295 = vmatprep.subr.mxu0 0.0
        %296 = vmatpush1.msra.mxu0 0.0
        %297 = vmatprep.subr.mxu0 0.0
        %298 = vmatpush1.msra.mxu0 0.0
        %299 = vmatprep.subr.mxu0 0.0
        %300 = vmatpush1.msra.mxu0 0.0
        %301 = vmatprep.subr.mxu0 0.0
        %302 = vmatpush1.msra.mxu0 0.0
        %303 = vmatprep.subr.mxu0 0.0
        %304 = vmatpush1.msra.mxu0 0.0
        %305 = vmatprep.subr.mxu0 0.0
        %306 = vmatpush1.msra.mxu0 0.0
        %307 = vmatprep.subr.mxu0 0.0
        %308 = vmatpush1.msra.mxu0 0.0
        %309 = vmatprep.subr.mxu0 0.0
        %310 = vmatpush1.msra.mxu0 0.0
        %311 = vmatprep.subr.mxu0 0.0
        %312 = vmatpush1.msra.mxu0 0.0
        %313 = vmatprep.subr.mxu0 0.0
        %314 = vmatpush1.msra.mxu0 0.0
        %315 = vmatprep.subr.mxu0 0.0
        %316 = vmatpush1.msra.mxu0 0.0
        %317 = vmatprep.subr.mxu0 0.0
        %318 = vmatpush1.msra.mxu0 0.0
        %319 = vmatprep.subr.mxu0 0.0
        %320 = vmatpush1.msra.mxu0 0.0
        %321 = vmatprep.subr.mxu0 0.0
        %322 = vmatpush1.msra.mxu0 0.0
        %323 = vmatprep.subr.mxu0 0.0
        %324 = vmatpush1.msra.mxu0 0.0
        %325 = vmatprep.subr.mxu0 0.0
        %326 = vmatpush1.msra.mxu0 0.0
        %327 = vmatprep.subr.mxu0 0.0
        %328 = vmatpush1.msra.mxu0 0.0
        %329 = vmatprep.subr.mxu0 0.0
        %330 = vmatpush1.msra.mxu0 0.0
        %331 = vmatprep.subr.mxu0 0.0
        %332 = vmatpush1.msra.mxu0 0.0
        %333 = vmatprep.subr.mxu0 0.0
        %334 = vmatpush1.msra.mxu0 0.0
        %335 = vmatprep.subr.mxu0 0.0
        %336 = vmatpush1.msra.mxu0 0.0
        %337 = vmatprep.subr.mxu0 0.0
        %338 = vmatpush1.msra.mxu0 0.0
        %339 = vmatprep.subr.mxu0 0.0
        %340 = vmatpush1.msra.mxu0 0.0
        %341 = vmatprep.subr.mxu0 0.0
        %342 = vmatpush1.msra.mxu0 0.0
        %343 = vmatprep.mubr.f32.mxu0 0.0
        %344 = vmatmul.mubr.f32.gmra.mrb[0].mxu0 %v190
        %v345 = vpop.f32.mrb[0].mxu0
        %v346 = vadd.f32 0.0, %v345
        %v347 = vpop.f32.mrb[0].mxu0
        %348 = vmatprep.mubr.f32.mxu0 0.0
        %349 = vmatmul.mubr.f32.gmra.mrb[0].mxu0 %v193
        %v350 = vpop.f32.mrb[0].mxu0
        %v351 = vadd.f32 0.0, %v350
        %v352 = vpop.f32.mrb[0].mxu0
        %353 = vdwg.mxu0
        %v355 = vsel %vm188, %v171, 0
        %v358 = vsel %vm188, %v172, 0
        %v360 = vsel %vm195, %v169, 0
        %v362 = vsel %vm195, %v178, 0
        %v364 = vsel %vm195, %v170, 0
        %366 = vmatprep.subr.mxu0 %v362
        %367 = vmatpush1.msra.mxu0 %v360
        %368 = vmatprep.subr.mxu0 0.0
        %369 = vmatpush1.msra.mxu0 0.0
        %370 = vmatprep.subr.mxu0 0.0
        %371 = vmatpush1.msra.mxu0 0.0
        %372 = vmatprep.subr.mxu0 0.0
        %373 = vmatpush1.msra.mxu0 0.0
        %374 = vmatprep.subr.mxu0 0.0
        %375 = vmatpush1.msra.mxu0 0.0
        %376 = vmatprep.subr.mxu0 0.0
        %377 = vmatpush1.msra.mxu0 0.0
        %378 = vmatprep.subr.mxu0 0.0
        %379 = vmatpush1.msra.mxu0 0.0
        %380 = vmatprep.subr.mxu0 0.0
        %381 = vmatpush1.msra.mxu0 0.0
        %382 = vmatprep.subr.mxu0 0.0
        %383 = vmatpush1.msra.mxu0 0.0
        %384 = vmatprep.subr.mxu0 0.0
        %385 = vmatpush1.msra.mxu0 0.0
        %386 = vmatprep.subr.mxu0 0.0
        %387 = vmatpush1.msra.mxu0 0.0
        %388 = vmatprep.subr.mxu0 0.0
        %389 = vmatpush1.msra.mxu0 0.0
        %390 = vmatprep.subr.mxu0 0.0
        %391 = vmatpush1.msra.mxu0 0.0
        %392 = vmatprep.subr.mxu0 0.0
        %393 = vmatpush1.msra.mxu0 0.0
        %394 = vmatprep.subr.mxu0 0.0
        %395 = vmatpush1.msra.mxu0 0.0
        %396 = vmatprep.subr.mxu0 0.0
        %397 = vmatpush1.msra.mxu0 0.0
        %398 = vmatprep.subr.mxu0 0.0
        %399 = vmatpush1.msra.mxu0 0.0
        %400 = vmatprep.subr.mxu0 0.0
        %401 = vmatpush1.msra.mxu0 0.0
        %402 = vmatprep.subr.mxu0 0.0
        %403 = vmatpush1.msra.mxu0 0.0
        %404 = vmatprep.subr.mxu0 0.0
        %405 = vmatpush1.msra.mxu0 0.0
        %406 = vmatprep.subr.mxu0 0.0
        %407 = vmatpush1.msra.mxu0 0.0
        %408 = vmatprep.subr.mxu0 0.0
        %409 = vmatpush1.msra.mxu0 0.0
        %410 = vmatprep.subr.mxu0 0.0
        %411 = vmatpush1.msra.mxu0 0.0
        %412 = vmatprep.subr.mxu0 0.0
        %413 = vmatpush1.msra.mxu0 0.0
        %414 = vmatprep.subr.mxu0 0.0
        %415 = vmatpush1.msra.mxu0 0.0
        %416 = vmatprep.subr.mxu0 0.0
        %417 = vmatpush1.msra.mxu0 0.0
        %418 = vmatprep.subr.mxu0 0.0
        %419 = vmatpush1.msra.mxu0 0.0
        %420 = vmatprep.subr.mxu0 0.0
        %421 = vmatpush1.msra.mxu0 0.0
        %422 = vmatprep.subr.mxu0 0.0
        %423 = vmatpush1.msra.mxu0 0.0
        %424 = vmatprep.subr.mxu0 0.0
        %425 = vmatpush1.msra.mxu0 0.0
        %426 = vmatprep.subr.mxu0 0.0
        %427 = vmatpush1.msra.mxu0 0.0
        %428 = vmatprep.subr.mxu0 0.0
        %429 = vmatpush1.msra.mxu0 0.0
        %430 = vmatprep.mubr.f32.mxu0 0.0
        %431 = vmatmul.mubr.f32.gmra.mrb[0].mxu0 %v355
        %v432 = vpop.f32.mrb[0].mxu0
        %v433 = vadd.f32 %v269, %v432
        %v434 = vpop.f32.mrb[0].mxu0
        %v435 = vadd.f32 %v271, %v434
        %436 = vmatprep.mubr.f32.mxu0 0.0
        %437 = vmatmul.mubr.f32.gmra.mrb[0].mxu0 %v358
        %v438 = vpop.f32.mrb[0].mxu0
        %v439 = vadd.f32 %v275, %v438
        %v440 = vpop.f32.mrb[0].mxu0
        %v441 = vadd.f32 %v277, %v440
        %442 = vdwg.mxu0
        %443 = vmatprep.subr.mxu0 0.0
        %444 = vmatpush1.msra.mxu0 %v364
        %445 = vmatprep.subr.mxu0 0.0
        %446 = vmatpush1.msra.mxu0 0.0
        %447 = vmatprep.subr.mxu0 0.0
        %448 = vmatpush1.msra.mxu0 0.0
        %449 = vmatprep.subr.mxu0 0.0
        %450 = vmatpush1.msra.mxu0 0.0
        %451 = vmatprep.subr.mxu0 0.0
        %452 = vmatpush1.msra.mxu0 0.0
        %453 = vmatprep.subr.mxu0 0.0
        %454 = vmatpush1.msra.mxu0 0.0
        %455 = vmatprep.subr.mxu0 0.0
        %456 = vmatpush1.msra.mxu0 0.0
        %457 = vmatprep.subr.mxu0 0.0
        %458 = vmatpush1.msra.mxu0 0.0
        %459 = vmatprep.subr.mxu0 0.0
        %460 = vmatpush1.msra.mxu0 0.0
        %461 = vmatprep.subr.mxu0 0.0
        %462 = vmatpush1.msra.mxu0 0.0
        %463 = vmatprep.subr.mxu0 0.0
        %464 = vmatpush1.msra.mxu0 0.0
        %465 = vmatprep.subr.mxu0 0.0
        %466 = vmatpush1.msra.mxu0 0.0
        %467 = vmatprep.subr.mxu0 0.0
        %468 = vmatpush1.msra.mxu0 0.0
        %469 = vmatprep.subr.mxu0 0.0
        %470 = vmatpush1.msra.mxu0 0.0
        %471 = vmatprep.subr.mxu0 0.0
        %472 = vmatpush1.msra.mxu0 0.0
        %473 = vmatprep.subr.mxu0 0.0
        %474 = vmatpush1.msra.mxu0 0.0
        %475 = vmatprep.subr.mxu0 0.0
        %476 = vmatpush1.msra.mxu0 0.0
        %477 = vmatprep.subr.mxu0 0.0
        %478 = vmatpush1.msra.mxu0 0.0
        %479 = vmatprep.subr.mxu0 0.0
        %480 = vmatpush1.msra.mxu0 0.0
        %481 = vmatprep.subr.mxu0 0.0
        %482 = vmatpush1.msra.mxu0 0.0
        %483 = vmatprep.subr.mxu0 0.0
        %484 = vmatpush1.msra.mxu0 0.0
        %485 = vmatprep.subr.mxu0 0.0
        %486 = vmatpush1.msra.mxu0 0.0
        %487 = vmatprep.subr.mxu0 0.0
        %488 = vmatpush1.msra.mxu0 0.0
        %489 = vmatprep.subr.mxu0 0.0
        %490 = vmatpush1.msra.mxu0 0.0
        %491 = vmatprep.subr.mxu0 0.0
        %492 = vmatpush1.msra.mxu0 0.0
        %493 = vmatprep.subr.mxu0 0.0
        %494 = vmatpush1.msra.mxu0 0.0
        %495 = vmatprep.subr.mxu0 0.0
        %496 = vmatpush1.msra.mxu0 0.0
        %497 = vmatprep.subr.mxu0 0.0
        %498 = vmatpush1.msra.mxu0 0.0
        %499 = vmatprep.subr.mxu0 0.0
        %500 = vmatpush1.msra.mxu0 0.0
        %501 = vmatprep.subr.mxu0 0.0
        %502 = vmatpush1.msra.mxu0 0.0
        %503 = vmatprep.subr.mxu0 0.0
        %504 = vmatpush1.msra.mxu0 0.0
        %505 = vmatprep.subr.mxu0 0.0
        %506 = vmatpush1.msra.mxu0 0.0
        %507 = vmatprep.mubr.f32.mxu0 0.0
        %508 = vmatmul.mubr.f32.gmra.mrb[0].mxu0 %v355
        %v509 = vpop.f32.mrb[0].mxu0
        %v510 = vadd.f32 %v346, %v509
        %v511 = vpop.f32.mrb[0].mxu0
        %512 = vmatprep.mubr.f32.mxu0 0.0
        %513 = vmatmul.mubr.f32.gmra.mrb[0].mxu0 %v358
        %v514 = vpop.f32.mrb[0].mxu0
        %v515 = vadd.f32 %v351, %v514
        %v516 = vpop.f32.mrb[0].mxu0
        %517 = vdwg.mxu0
        %v518 = vld [vmem:[%s168] sm:$0xff]
        %v519 = vld [vmem:[%s168 + $0x8] sm:$0xf]
        %s520 = scalar_lea.vmem %s0, 32
        %v521 = vld [vmem:[%s520] sm:$0xff]
        %v522 = vld [vmem:[%s520 + $0x8] sm:$0xff]
        %v525 = vcombine.high %v518, %v518
        %526 = vrot.lane.b32.xlu0 %v518, 126
        %v527 = vpop.permute.xlu0 %526
        %528 = vrot.lane.b32.xlu0 %v525, 126
        %v529 = vpop.permute.xlu0 %528
        %530 = vrot.lane.b32.xlu0 %v519, 126
        %v531 = vpop.permute.xlu0 %530
        %vm532 = vcmask 1031168
        %v533 = vsel %vm532, %v527, %v529
        %v534 = vsel %vm532, %v529, %v531
        %v536 = vsel %vm188, %v521, 0
        %v539 = vsel %vm188, %v522, 0
        %v541 = vsel %vm195, %v533, 0
        %v543 = vsel %vm195, %v534, 0
        %v545 = vsel %vm195, %v531, 0
        %547 = vmatprep.subr.mxu0 %v543
        %548 = vmatpush1.msra.mxu0 %v541
        %549 = vmatprep.subr.mxu0 0.0
        %550 = vmatpush1.msra.mxu0 0.0
        %551 = vmatprep.subr.mxu0 0.0
        %552 = vmatpush1.msra.mxu0 0.0
        %553 = vmatprep.subr.mxu0 0.0
        %554 = vmatpush1.msra.mxu0 0.0
        %555 = vmatprep.subr.mxu0 0.0
        %556 = vmatpush1.msra.mxu0 0.0
        %557 = vmatprep.subr.mxu0 0.0
        %558 = vmatpush1.msra.mxu0 0.0
        %559 = vmatprep.subr.mxu0 0.0
        %560 = vmatpush1.msra.mxu0 0.0
        %561 = vmatprep.subr.mxu0 0.0
        %562 = vmatpush1.msra.mxu0 0.0
        %563 = vmatprep.subr.mxu0 0.0
        %564 = vmatpush1.msra.mxu0 0.0
        %565 = vmatprep.subr.mxu0 0.0
        %566 = vmatpush1.msra.mxu0 0.0
        %567 = vmatprep.subr.mxu0 0.0
        %568 = vmatpush1.msra.mxu0 0.0
        %569 = vmatprep.subr.mxu0 0.0
        %570 = vmatpush1.msra.mxu0 0.0
        %571 = vmatprep.subr.mxu0 0.0
        %572 = vmatpush1.msra.mxu0 0.0
        %573 = vmatprep.subr.mxu0 0.0
        %574 = vmatpush1.msra.mxu0 0.0
        %575 = vmatprep.subr.mxu0 0.0
        %576 = vmatpush1.msra.mxu0 0.0
        %577 = vmatprep.subr.mxu0 0.0
        %578 = vmatpush1.msra.mxu0 0.0
        %579 = vmatprep.subr.mxu0 0.0
        %580 = vmatpush1.msra.mxu0 0.0
        %581 = vmatprep.subr.mxu0 0.0
        %582 = vmatpush1.msra.mxu0 0.0
        %583 = vmatprep.subr.mxu0 0.0
        %584 = vmatpush1.msra.mxu0 0.0
        %585 = vmatprep.subr.mxu0 0.0
        %586 = vmatpush1.msra.mxu0 0.0
        %587 = vmatprep.subr.mxu0 0.0
        %588 = vmatpush1.msra.mxu0 0.0
        %589 = vmatprep.subr.mxu0 0.0
        %590 = vmatpush1.msra.mxu0 0.0
        %591 = vmatprep.subr.mxu0 0.0
        %592 = vmatpush1.msra.mxu0 0.0
        %593 = vmatprep.subr.mxu0 0.0
        %594 = vmatpush1.msra.mxu0 0.0
        %595 = vmatprep.subr.mxu0 0.0
        %596 = vmatpush1.msra.mxu0 0.0
        %597 = vmatprep.subr.mxu0 0.0
        %598 = vmatpush1.msra.mxu0 0.0
        %599 = vmatprep.subr.mxu0 0.0
        %600 = vmatpush1.msra.mxu0 0.0
        %601 = vmatprep.subr.mxu0 0.0
        %602 = vmatpush1.msra.mxu0 0.0
        %603 = vmatprep.subr.mxu0 0.0
        %604 = vmatpush1.msra.mxu0 0.0
        %605 = vmatprep.subr.mxu0 0.0
        %606 = vmatpush1.msra.mxu0 0.0
        %607 = vmatprep.subr.mxu0 0.0
        %608 = vmatpush1.msra.mxu0 0.0
        %609 = vmatprep.subr.mxu0 0.0
        %610 = vmatpush1.msra.mxu0 0.0
        %611 = vmatprep.mubr.f32.mxu0 0.0
        %612 = vmatmul.mubr.f32.gmra.mrb[0].mxu0 %v536
        %v613 = vpop.f32.mrb[0].mxu0
        %v614 = vadd.f32 0.0, %v613
        %v615 = vpop.f32.mrb[0].mxu0
        %v616 = vadd.f32 0.0, %v615
        %617 = vmatprep.mubr.f32.mxu0 0.0
        %618 = vmatmul.mubr.f32.gmra.mrb[0].mxu0 %v539
        %v619 = vpop.f32.mrb[0].mxu0
        %v620 = vadd.f32 0.0, %v619
        %v621 = vpop.f32.mrb[0].mxu0
        %v622 = vadd.f32 0.0, %v621
        %623 = vdwg.mxu0
        %624 = vmatprep.subr.mxu0 0.0
        %625 = vmatpush1.msra.mxu0 %v545
        %626 = vmatprep.subr.mxu0 0.0
        %627 = vmatpush1.msra.mxu0 0.0
        %628 = vmatprep.subr.mxu0 0.0
        %629 = vmatpush1.msra.mxu0 0.0
        %630 = vmatprep.subr.mxu0 0.0
        %631 = vmatpush1.msra.mxu0 0.0
        %632 = vmatprep.subr.mxu0 0.0
        %633 = vmatpush1.msra.mxu0 0.0
        %634 = vmatprep.subr.mxu0 0.0
        %635 = vmatpush1.msra.mxu0 0.0
        %636 = vmatprep.subr.mxu0 0.0
        %637 = vmatpush1.msra.mxu0 0.0
        %638 = vmatprep.subr.mxu0 0.0
        %639 = vmatpush1.msra.mxu0 0.0
        %640 = vmatprep.subr.mxu0 0.0
        %641 = vmatpush1.msra.mxu0 0.0
        %642 = vmatprep.subr.mxu0 0.0
        %643 = vmatpush1.msra.mxu0 0.0
        %644 = vmatprep.subr.mxu0 0.0
        %645 = vmatpush1.msra.mxu0 0.0
        %646 = vmatprep.subr.mxu0 0.0
        %647 = vmatpush1.msra.mxu0 0.0
        %648 = vmatprep.subr.mxu0 0.0
        %649 = vmatpush1.msra.mxu0 0.0
        %650 = vmatprep.subr.mxu0 0.0
        %651 = vmatpush1.msra.mxu0 0.0
        %652 = vmatprep.subr.mxu0 0.0
        %653 = vmatpush1.msra.mxu0 0.0
        %654 = vmatprep.subr.mxu0 0.0
        %655 = vmatpush1.msra.mxu0 0.0
        %656 = vmatprep.subr.mxu0 0.0
        %657 = vmatpush1.msra.mxu0 0.0
        %658 = vmatprep.subr.mxu0 0.0
        %659 = vmatpush1.msra.mxu0 0.0
        %660 = vmatprep.subr.mxu0 0.0
        %661 = vmatpush1.msra.mxu0 0.0
        %662 = vmatprep.subr.mxu0 0.0
        %663 = vmatpush1.msra.mxu0 0.0
        %664 = vmatprep.subr.mxu0 0.0
        %665 = vmatpush1.msra.mxu0 0.0
        %666 = vmatprep.subr.mxu0 0.0
        %667 = vmatpush1.msra.mxu0 0.0
        %668 = vmatprep.subr.mxu0 0.0
        %669 = vmatpush1.msra.mxu0 0.0
        %670 = vmatprep.subr.mxu0 0.0
        %671 = vmatpush1.msra.mxu0 0.0
        %672 = vmatprep.subr.mxu0 0.0
        %673 = vmatpush1.msra.mxu0 0.0
        %674 = vmatprep.subr.mxu0 0.0
        %675 = vmatpush1.msra.mxu0 0.0
        %676 = vmatprep.subr.mxu0 0.0
        %677 = vmatpush1.msra.mxu0 0.0
        %678 = vmatprep.subr.mxu0 0.0
        %679 = vmatpush1.msra.mxu0 0.0
        %680 = vmatprep.subr.mxu0 0.0
        %681 = vmatpush1.msra.mxu0 0.0
        %682 = vmatprep.subr.mxu0 0.0
        %683 = vmatpush1.msra.mxu0 0.0
        %684 = vmatprep.subr.mxu0 0.0
        %685 = vmatpush1.msra.mxu0 0.0
        %686 = vmatprep.subr.mxu0 0.0
        %687 = vmatpush1.msra.mxu0 0.0
        %688 = vmatprep.mubr.f32.mxu0 0.0
        %689 = vmatmul.mubr.f32.gmra.mrb[0].mxu0 %v536
        %v690 = vpop.f32.mrb[0].mxu0
        %v691 = vadd.f32 0.0, %v690
        %v692 = vpop.f32.mrb[0].mxu0
        %693 = vmatprep.mubr.f32.mxu0 0.0
        %694 = vmatmul.mubr.f32.gmra.mrb[0].mxu0 %v539
        %v695 = vpop.f32.mrb[0].mxu0
        %v696 = vadd.f32 0.0, %v695
        %v697 = vpop.f32.mrb[0].mxu0
        %698 = vdwg.mxu0
        %v699 = vadd.f32 %v433, %v614
        %v700 = vadd.f32 %v435, %v616
        %v701 = vadd.f32 %v510, %v691
        %v702 = vadd.f32 %v439, %v620
        %v703 = vadd.f32 %v441, %v622
        %v704 = vadd.f32 %v515, %v696
        %v705 = vld [vmem:[%s168] sm:$0xff]
        %v706 = vld [vmem:[%s168 + $0x8] sm:$0xf]
        %s707 = scalar_lea.vmem %s0, 48
        %v708 = vld [vmem:[%s707] sm:$0xff]
        %v709 = vld [vmem:[%s707 + $0x8] sm:$0xff]
        %v712 = vcombine.high %v705, %v705
        %713 = vrot.lane.b32.xlu0 %v705, 110
        %v714 = vpop.permute.xlu0 %713
        %715 = vrot.lane.b32.xlu0 %v712, 110
        %v716 = vpop.permute.xlu0 %715
        %717 = vrot.lane.b32.xlu0 %v706, 110
        %v718 = vpop.permute.xlu0 %717
        %vm719 = vcmask 900096
        %v720 = vsel %vm719, %v714, %v716
        %v721 = vsel %vm719, %v716, %v718
        %v723 = vsel %vm188, %v708, 0
        %v726 = vsel %vm188, %v709, 0
        %v728 = vsel %vm195, %v720, 0
        %v730 = vsel %vm195, %v721, 0
        %v732 = vsel %vm195, %v718, 0
        %734 = vmatprep.subr.mxu0 %v730
        %735 = vmatpush1.msra.mxu0 %v728
        %736 = vmatprep.subr.mxu0 0.0
        %737 = vmatpush1.msra.mxu0 0.0
        %738 = vmatprep.subr.mxu0 0.0
        %739 = vmatpush1.msra.mxu0 0.0
        %740 = vmatprep.subr.mxu0 0.0
        %741 = vmatpush1.msra.mxu0 0.0
        %742 = vmatprep.subr.mxu0 0.0
        %743 = vmatpush1.msra.mxu0 0.0
        %744 = vmatprep.subr.mxu0 0.0
        %745 = vmatpush1.msra.mxu0 0.0
        %746 = vmatprep.subr.mxu0 0.0
        %747 = vmatpush1.msra.mxu0 0.0
        %748 = vmatprep.subr.mxu0 0.0
        %749 = vmatpush1.msra.mxu0 0.0
        %750 = vmatprep.subr.mxu0 0.0
        %751 = vmatpush1.msra.mxu0 0.0
        %752 = vmatprep.subr.mxu0 0.0
        %753 = vmatpush1.msra.mxu0 0.0
        %754 = vmatprep.subr.mxu0 0.0
        %755 = vmatpush1.msra.mxu0 0.0
        %756 = vmatprep.subr.mxu0 0.0
        %757 = vmatpush1.msra.mxu0 0.0
        %758 = vmatprep.subr.mxu0 0.0
        %759 = vmatpush1.msra.mxu0 0.0
        %760 = vmatprep.subr.mxu0 0.0
        %761 = vmatpush1.msra.mxu0 0.0
        %762 = vmatprep.subr.mxu0 0.0
        %763 = vmatpush1.msra.mxu0 0.0
        %764 = vmatprep.subr.mxu0 0.0
        %765 = vmatpush1.msra.mxu0 0.0
        %766 = vmatprep.subr.mxu0 0.0
        %767 = vmatpush1.msra.mxu0 0.0
        %768 = vmatprep.subr.mxu0 0.0
        %769 = vmatpush1.msra.mxu0 0.0
        %770 = vmatprep.subr.mxu0 0.0
        %771 = vmatpush1.msra.mxu0 0.0
        %772 = vmatprep.subr.mxu0 0.0
        %773 = vmatpush1.msra.mxu0 0.0
        %774 = vmatprep.subr.mxu0 0.0
        %775 = vmatpush1.msra.mxu0 0.0
        %776 = vmatprep.subr.mxu0 0.0
        %777 = vmatpush1.msra.mxu0 0.0
        %778 = vmatprep.subr.mxu0 0.0
        %779 = vmatpush1.msra.mxu0 0.0
        %780 = vmatprep.subr.mxu0 0.0
        %781 = vmatpush1.msra.mxu0 0.0
        %782 = vmatprep.subr.mxu0 0.0
        %783 = vmatpush1.msra.mxu0 0.0
        %784 = vmatprep.subr.mxu0 0.0
        %785 = vmatpush1.msra.mxu0 0.0
        %786 = vmatprep.subr.mxu0 0.0
        %787 = vmatpush1.msra.mxu0 0.0
        %788 = vmatprep.subr.mxu0 0.0
        %789 = vmatpush1.msra.mxu0 0.0
        %790 = vmatprep.subr.mxu0 0.0
        %791 = vmatpush1.msra.mxu0 0.0
        %792 = vmatprep.subr.mxu0 0.0
        %793 = vmatpush1.msra.mxu0 0.0
        %794 = vmatprep.subr.mxu0 0.0
        %795 = vmatpush1.msra.mxu0 0.0
        %796 = vmatprep.subr.mxu0 0.0
        %797 = vmatpush1.msra.mxu0 0.0
        %798 = vmatprep.mubr.f32.mxu0 0.0
        %799 = vmatmul.mubr.f32.gmra.mrb[0].mxu0 %v723
        %v800 = vpop.f32.mrb[0].mxu0
        %v801 = vadd.f32 0.0, %v800
        %v802 = vpop.f32.mrb[0].mxu0
        %v803 = vadd.f32 0.0, %v802
        %804 = vmatprep.mubr.f32.mxu0 0.0
        %805 = vmatmul.mubr.f32.gmra.mrb[0].mxu0 %v726
        %v806 = vpop.f32.mrb[0].mxu0
        %v807 = vadd.f32 0.0, %v806
        %v808 = vpop.f32.mrb[0].mxu0
        %v809 = vadd.f32 0.0, %v808
        %810 = vdwg.mxu0
        %811 = vmatprep.subr.mxu0 0.0
        %812 = vmatpush1.msra.mxu0 %v732
        %813 = vmatprep.subr.mxu0 0.0
        %814 = vmatpush1.msra.mxu0 0.0
        %815 = vmatprep.subr.mxu0 0.0
        %816 = vmatpush1.msra.mxu0 0.0
        %817 = vmatprep.subr.mxu0 0.0
        %818 = vmatpush1.msra.mxu0 0.0
        %819 = vmatprep.subr.mxu0 0.0
        %820 = vmatpush1.msra.mxu0 0.0
        %821 = vmatprep.subr.mxu0 0.0
        %822 = vmatpush1.msra.mxu0 0.0
        %823 = vmatprep.subr.mxu0 0.0
        %824 = vmatpush1.msra.mxu0 0.0
        %825 = vmatprep.subr.mxu0 0.0
        %826 = vmatpush1.msra.mxu0 0.0
        %827 = vmatprep.subr.mxu0 0.0
        %828 = vmatpush1.msra.mxu0 0.0
        %829 = vmatprep.subr.mxu0 0.0
        %830 = vmatpush1.msra.mxu0 0.0
        %831 = vmatprep.subr.mxu0 0.0
        %832 = vmatpush1.msra.mxu0 0.0
        %833 = vmatprep.subr.mxu0 0.0
        %834 = vmatpush1.msra.mxu0 0.0
        %835 = vmatprep.subr.mxu0 0.0
        %836 = vmatpush1.msra.mxu0 0.0
        %837 = vmatprep.subr.mxu0 0.0
        %838 = vmatpush1.msra.mxu0 0.0
        %839 = vmatprep.subr.mxu0 0.0
        %840 = vmatpush1.msra.mxu0 0.0
        %841 = vmatprep.subr.mxu0 0.0
        %842 = vmatpush1.msra.mxu0 0.0
        %843 = vmatprep.subr.mxu0 0.0
        %844 = vmatpush1.msra.mxu0 0.0
        %845 = vmatprep.subr.mxu0 0.0
        %846 = vmatpush1.msra.mxu0 0.0
        %847 = vmatprep.subr.mxu0 0.0
        %848 = vmatpush1.msra.mxu0 0.0
        %849 = vmatprep.subr.mxu0 0.0
        %850 = vmatpush1.msra.mxu0 0.0
        %851 = vmatprep.subr.mxu0 0.0
        %852 = vmatpush1.msra.mxu0 0.0
        %853 = vmatprep.subr.mxu0 0.0
        %854 = vmatpush1.msra.mxu0 0.0
        %855 = vmatprep.subr.mxu0 0.0
        %856 = vmatpush1.msra.mxu0 0.0
        %857 = vmatprep.subr.mxu0 0.0
        %858 = vmatpush1.msra.mxu0 0.0
        %859 = vmatprep.subr.mxu0 0.0
        %860 = vmatpush1.msra.mxu0 0.0
        %861 = vmatprep.subr.mxu0 0.0
        %862 = vmatpush1.msra.mxu0 0.0
        %863 = vmatprep.subr.mxu0 0.0
        %864 = vmatpush1.msra.mxu0 0.0
        %865 = vmatprep.subr.mxu0 0.0
        %866 = vmatpush1.msra.mxu0 0.0
        %867 = vmatprep.subr.mxu0 0.0
        %868 = vmatpush1.msra.mxu0 0.0
        %869 = vmatprep.subr.mxu0 0.0
        %870 = vmatpush1.msra.mxu0 0.0
        %871 = vmatprep.subr.mxu0 0.0
        %872 = vmatpush1.msra.mxu0 0.0
        %873 = vmatprep.subr.mxu0 0.0
        %874 = vmatpush1.msra.mxu0 0.0
        %875 = vmatprep.mubr.f32.mxu0 0.0
        %876 = vmatmul.mubr.f32.gmra.mrb[0].mxu0 %v723
        %v877 = vpop.f32.mrb[0].mxu0
        %v878 = vadd.f32 0.0, %v877
        %v879 = vpop.f32.mrb[0].mxu0
        %880 = vmatprep.mubr.f32.mxu0 0.0
        %881 = vmatmul.mubr.f32.gmra.mrb[0].mxu0 %v726
        %v882 = vpop.f32.mrb[0].mxu0
        %v883 = vadd.f32 0.0, %v882
        %v884 = vpop.f32.mrb[0].mxu0
        %885 = vdwg.mxu0
        %v886 = vadd.f32 %v699, %v801
        %v887 = vadd.f32 %v700, %v803
        %v888 = vadd.f32 %v701, %v878
        %v889 = vadd.f32 %v702, %v807
        %v890 = vadd.f32 %v703, %v809
        %v891 = vadd.f32 %v704, %v883
        %v892 = vld [vmem:[%s168] sm:$0xff]
        %v893 = vld [vmem:[%s168 + $0x8] sm:$0xf]
        %s894 = scalar_lea.vmem %s0, 64
        %v895 = vld [vmem:[%s894] sm:$0xff]
        %v896 = vld [vmem:[%s894 + $0x8] sm:$0xff]
        %v899 = vcombine.high %v892, %v892
        %900 = vrot.lane.b32.xlu0 %v892, 109
        %v901 = vpop.permute.xlu0 %900
        %902 = vrot.lane.b32.xlu0 %v899, 109
        %v903 = vpop.permute.xlu0 %902
        %904 = vrot.lane.b32.xlu0 %v893, 109
        %v905 = vpop.permute.xlu0 %904
        %vm906 = vcmask 891904
        %v907 = vsel %vm906, %v901, %v903
        %v908 = vsel %vm906, %v903, %v905
        %v910 = vsel %vm188, %v895, 0
        %v913 = vsel %vm188, %v896, 0
        %v915 = vsel %vm195, %v907, 0
        %v917 = vsel %vm195, %v908, 0
        %v919 = vsel %vm195, %v905, 0
        %921 = vmatprep.subr.mxu0 %v917
        %922 = vmatpush1.msra.mxu0 %v915
        %923 = vmatprep.subr.mxu0 0.0
        %924 = vmatpush1.msra.mxu0 0.0
        %925 = vmatprep.subr.mxu0 0.0
        %926 = vmatpush1.msra.mxu0 0.0
        %927 = vmatprep.subr.mxu0 0.0
        %928 = vmatpush1.msra.mxu0 0.0
        %929 = vmatprep.subr.mxu0 0.0
        %930 = vmatpush1.msra.mxu0 0.0
        %931 = vmatprep.subr.mxu0 0.0
        %932 = vmatpush1.msra.mxu0 0.0
        %933 = vmatprep.subr.mxu0 0.0
        %934 = vmatpush1.msra.mxu0 0.0
        %935 = vmatprep.subr.mxu0 0.0
        %936 = vmatpush1.msra.mxu0 0.0
        %937 = vmatprep.subr.mxu0 0.0
        %938 = vmatpush1.msra.mxu0 0.0
        %939 = vmatprep.subr.mxu0 0.0
        %940 = vmatpush1.msra.mxu0 0.0
        %941 = vmatprep.subr.mxu0 0.0
        %942 = vmatpush1.msra.mxu0 0.0
        %943 = vmatprep.subr.mxu0 0.0
        %944 = vmatpush1.msra.mxu0 0.0
        %945 = vmatprep.subr.mxu0 0.0
        %946 = vmatpush1.msra.mxu0 0.0
        %947 = vmatprep.subr.mxu0 0.0
        %948 = vmatpush1.msra.mxu0 0.0
        %949 = vmatprep.subr.mxu0 0.0
        %950 = vmatpush1.msra.mxu0 0.0
        %951 = vmatprep.subr.mxu0 0.0
        %952 = vmatpush1.msra.mxu0 0.0
        %953 = vmatprep.subr.mxu0 0.0
        %954 = vmatpush1.msra.mxu0 0.0
        %955 = vmatprep.subr.mxu0 0.0
        %956 = vmatpush1.msra.mxu0 0.0
        %957 = vmatprep.subr.mxu0 0.0
        %958 = vmatpush1.msra.mxu0 0.0
        %959 = vmatprep.subr.mxu0 0.0
        %960 = vmatpush1.msra.mxu0 0.0
        %961 = vmatprep.subr.mxu0 0.0
        %962 = vmatpush1.msra.mxu0 0.0
        %963 = vmatprep.subr.mxu0 0.0
        %964 = vmatpush1.msra.mxu0 0.0
        %965 = vmatprep.subr.mxu0 0.0
        %966 = vmatpush1.msra.mxu0 0.0
        %967 = vmatprep.subr.mxu0 0.0
        %968 = vmatpush1.msra.mxu0 0.0
        %969 = vmatprep.subr.mxu0 0.0
        %970 = vmatpush1.msra.mxu0 0.0
        %971 = vmatprep.subr.mxu0 0.0
        %972 = vmatpush1.msra.mxu0 0.0
        %973 = vmatprep.subr.mxu0 0.0
        %974 = vmatpush1.msra.mxu0 0.0
        %975 = vmatprep.subr.mxu0 0.0
        %976 = vmatpush1.msra.mxu0 0.0
        %977 = vmatprep.subr.mxu0 0.0
        %978 = vmatpush1.msra.mxu0 0.0
        %979 = vmatprep.subr.mxu0 0.0
        %980 = vmatpush1.msra.mxu0 0.0
        %981 = vmatprep.subr.mxu0 0.0
        %982 = vmatpush1.msra.mxu0 0.0
        %983 = vmatprep.subr.mxu0 0.0
        %984 = vmatpush1.msra.mxu0 0.0
        %985 = vmatprep.mubr.f32.mxu0 0.0
        %986 = vmatmul.mubr.f32.gmra.mrb[0].mxu0 %v910
        %v987 = vpop.f32.mrb[0].mxu0
        %v988 = vadd.f32 0.0, %v987
        %v989 = vpop.f32.mrb[0].mxu0
        %v990 = vadd.f32 0.0, %v989
        %991 = vmatprep.mubr.f32.mxu0 0.0
        %992 = vmatmul.mubr.f32.gmra.mrb[0].mxu0 %v913
        %v993 = vpop.f32.mrb[0].mxu0
        %v994 = vadd.f32 0.0, %v993
        %v995 = vpop.f32.mrb[0].mxu0
        %v996 = vadd.f32 0.0, %v995
        %997 = vdwg.mxu0
        %998 = vmatprep.subr.mxu0 0.0
        %999 = vmatpush1.msra.mxu0 %v919
        %1000 = vmatprep.subr.mxu0 0.0
        %1001 = vmatpush1.msra.mxu0 0.0
        %1002 = vmatprep.subr.mxu0 0.0
        %1003 = vmatpush1.msra.mxu0 0.0
        %1004 = vmatprep.subr.mxu0 0.0
        %1005 = vmatpush1.msra.mxu0 0.0
        %1006 = vmatprep.subr.mxu0 0.0
        %1007 = vmatpush1.msra.mxu0 0.0
        %1008 = vmatprep.subr.mxu0 0.0
        %1009 = vmatpush1.msra.mxu0 0.0
        %1010 = vmatprep.subr.mxu0 0.0
        %1011 = vmatpush1.msra.mxu0 0.0
        %1012 = vmatprep.subr.mxu0 0.0
        %1013 = vmatpush1.msra.mxu0 0.0
        %1014 = vmatprep.subr.mxu0 0.0
        %1015 = vmatpush1.msra.mxu0 0.0
        %1016 = vmatprep.subr.mxu0 0.0
        %1017 = vmatpush1.msra.mxu0 0.0
        %1018 = vmatprep.subr.mxu0 0.0
        %1019 = vmatpush1.msra.mxu0 0.0
        %1020 = vmatprep.subr.mxu0 0.0
        %1021 = vmatpush1.msra.mxu0 0.0
        %1022 = vmatprep.subr.mxu0 0.0
        %1023 = vmatpush1.msra.mxu0 0.0
        %1024 = vmatprep.subr.mxu0 0.0
        %1025 = vmatpush1.msra.mxu0 0.0
        %1026 = vmatprep.subr.mxu0 0.0
        %1027 = vmatpush1.msra.mxu0 0.0
        %1028 = vmatprep.subr.mxu0 0.0
        %1029 = vmatpush1.msra.mxu0 0.0
        %1030 = vmatprep.subr.mxu0 0.0
        %1031 = vmatpush1.msra.mxu0 0.0
        %1032 = vmatprep.subr.mxu0 0.0
        %1033 = vmatpush1.msra.mxu0 0.0
        %1034 = vmatprep.subr.mxu0 0.0
        %1035 = vmatpush1.msra.mxu0 0.0
        %1036 = vmatprep.subr.mxu0 0.0
        %1037 = vmatpush1.msra.mxu0 0.0
        %1038 = vmatprep.subr.mxu0 0.0
        %1039 = vmatpush1.msra.mxu0 0.0
        %1040 = vmatprep.subr.mxu0 0.0
        %1041 = vmatpush1.msra.mxu0 0.0
        %1042 = vmatprep.subr.mxu0 0.0
        %1043 = vmatpush1.msra.mxu0 0.0
        %1044 = vmatprep.subr.mxu0 0.0
        %1045 = vmatpush1.msra.mxu0 0.0
        %1046 = vmatprep.subr.mxu0 0.0
        %1047 = vmatpush1.msra.mxu0 0.0
        %1048 = vmatprep.subr.mxu0 0.0
        %1049 = vmatpush1.msra.mxu0 0.0
        %1050 = vmatprep.subr.mxu0 0.0
        %1051 = vmatpush1.msra.mxu0 0.0
        %1052 = vmatprep.subr.mxu0 0.0
        %1053 = vmatpush1.msra.mxu0 0.0
        %1054 = vmatprep.subr.mxu0 0.0
        %1055 = vmatpush1.msra.mxu0 0.0
        %1056 = vmatprep.subr.mxu0 0.0
        %1057 = vmatpush1.msra.mxu0 0.0
        %1058 = vmatprep.subr.mxu0 0.0
        %1059 = vmatpush1.msra.mxu0 0.0
        %1060 = vmatprep.subr.mxu0 0.0
        %1061 = vmatpush1.msra.mxu0 0.0
        %1062 = vmatprep.mubr.f32.mxu0 0.0
        %1063 = vmatmul.mubr.f32.gmra.mrb[0].mxu0 %v910
        %v1064 = vpop.f32.mrb[0].mxu0
        %v1065 = vadd.f32 0.0, %v1064
        %v1066 = vpop.f32.mrb[0].mxu0
        %1067 = vmatprep.mubr.f32.mxu0 0.0
        %1068 = vmatmul.mubr.f32.gmra.mrb[0].mxu0 %v913
        %v1069 = vpop.f32.mrb[0].mxu0
        %v1070 = vadd.f32 0.0, %v1069
        %v1071 = vpop.f32.mrb[0].mxu0
        %1072 = vdwg.mxu0
        %v1073 = vadd.f32 %v886, %v988
        %v1074 = vadd.f32 %v887, %v990
        %v1075 = vadd.f32 %v888, %v1065
        %v1076 = vadd.f32 %v889, %v994
        %v1077 = vadd.f32 %v890, %v996
        %v1078 = vadd.f32 %v891, %v1070
        %v1079 = vld [vmem:[%s168] sm:$0xff]
        %v1080 = vld [vmem:[%s168 + $0x8] sm:$0xf]
        %s1081 = scalar_lea.vmem %s0, 80
        %v1082 = vld [vmem:[%s1081] sm:$0xff]
        %v1083 = vld [vmem:[%s1081 + $0x8] sm:$0xff]
        %v1086 = vcombine.high %v1079, %v1079
        %1087 = vrot.lane.b32.xlu0 %v1079, 108
        %v1088 = vpop.permute.xlu0 %1087
        %1089 = vrot.lane.b32.xlu0 %v1086, 108
        %v1090 = vpop.permute.xlu0 %1089
        %1091 = vrot.lane.b32.xlu0 %v1080, 108
        %v1092 = vpop.permute.xlu0 %1091
        %vm1093 = vcmask 883712
        %v1094 = vsel %vm1093, %v1088, %v1090
        %v1095 = vsel %vm1093, %v1090, %v1092
        %v1097 = vsel %vm188, %v1082, 0
        %v1100 = vsel %vm188, %v1083, 0
        %v1102 = vsel %vm195, %v1094, 0
        %v1104 = vsel %vm195, %v1095, 0
        %v1106 = vsel %vm195, %v1092, 0
        %1108 = vmatprep.subr.mxu0 %v1104
        %1109 = vmatpush1.msra.mxu0 %v1102
        %1110 = vmatprep.subr.mxu0 0.0
        %1111 = vmatpush1.msra.mxu0 0.0
        %1112 = vmatprep.subr.mxu0 0.0
        %1113 = vmatpush1.msra.mxu0 0.0
        %1114 = vmatprep.subr.mxu0 0.0
        %1115 = vmatpush1.msra.mxu0 0.0
        %1116 = vmatprep.subr.mxu0 0.0
        %1117 = vmatpush1.msra.mxu0 0.0
        %1118 = vmatprep.subr.mxu0 0.0
        %1119 = vmatpush1.msra.mxu0 0.0
        %1120 = vmatprep.subr.mxu0 0.0
        %1121 = vmatpush1.msra.mxu0 0.0
        %1122 = vmatprep.subr.mxu0 0.0
        %1123 = vmatpush1.msra.mxu0 0.0
        %1124 = vmatprep.subr.mxu0 0.0
        %1125 = vmatpush1.msra.mxu0 0.0
        %1126 = vmatprep.subr.mxu0 0.0
        %1127 = vmatpush1.msra.mxu0 0.0
        %1128 = vmatprep.subr.mxu0 0.0
        %1129 = vmatpush1.msra.mxu0 0.0
        %1130 = vmatprep.subr.mxu0 0.0
        %1131 = vmatpush1.msra.mxu0 0.0
        %1132 = vmatprep.subr.mxu0 0.0
        %1133 = vmatpush1.msra.mxu0 0.0
        %1134 = vmatprep.subr.mxu0 0.0
        %1135 = vmatpush1.msra.mxu0 0.0
        %1136 = vmatprep.subr.mxu0 0.0
        %1137 = vmatpush1.msra.mxu0 0.0
        %1138 = vmatprep.subr.mxu0 0.0
        %1139 = vmatpush1.msra.mxu0 0.0
        %1140 = vmatprep.subr.mxu0 0.0
        %1141 = vmatpush1.msra.mxu0 0.0
        %1142 = vmatprep.subr.mxu0 0.0
        %1143 = vmatpush1.msra.mxu0 0.0
        %1144 = vmatprep.subr.mxu0 0.0
        %1145 = vmatpush1.msra.mxu0 0.0
        %1146 = vmatprep.subr.mxu0 0.0
        %1147 = vmatpush1.msra.mxu0 0.0
        %1148 = vmatprep.subr.mxu0 0.0
        %1149 = vmatpush1.msra.mxu0 0.0
        %1150 = vmatprep.subr.mxu0 0.0
        %1151 = vmatpush1.msra.mxu0 0.0
        %1152 = vmatprep.subr.mxu0 0.0
        %1153 = vmatpush1.msra.mxu0 0.0
        %1154 = vmatprep.subr.mxu0 0.0
        %1155 = vmatpush1.msra.mxu0 0.0
        %1156 = vmatprep.subr.mxu0 0.0
        %1157 = vmatpush1.msra.mxu0 0.0
        %1158 = vmatprep.subr.mxu0 0.0
        %1159 = vmatpush1.msra.mxu0 0.0
        %1160 = vmatprep.subr.mxu0 0.0
        %1161 = vmatpush1.msra.mxu0 0.0
        %1162 = vmatprep.subr.mxu0 0.0
        %1163 = vmatpush1.msra.mxu0 0.0
        %1164 = vmatprep.subr.mxu0 0.0
        %1165 = vmatpush1.msra.mxu0 0.0
        %1166 = vmatprep.subr.mxu0 0.0
        %1167 = vmatpush1.msra.mxu0 0.0
        %1168 = vmatprep.subr.mxu0 0.0
        %1169 = vmatpush1.msra.mxu0 0.0
        %1170 = vmatprep.subr.mxu0 0.0
        %1171 = vmatpush1.msra.mxu0 0.0
        %1172 = vmatprep.mubr.f32.mxu0 0.0
        %1173 = vmatmul.mubr.f32.gmra.mrb[0].mxu0 %v1097
        %v1174 = vpop.f32.mrb[0].mxu0
        %v1175 = vadd.f32 0.0, %v1174
        %v1176 = vpop.f32.mrb[0].mxu0
        %v1177 = vadd.f32 0.0, %v1176
        %1178 = vmatprep.mubr.f32.mxu0 0.0
        %1179 = vmatmul.mubr.f32.gmra.mrb[0].mxu0 %v1100
        %v1180 = vpop.f32.mrb[0].mxu0
        %v1181 = vadd.f32 0.0, %v1180
        %v1182 = vpop.f32.mrb[0].mxu0
        %v1183 = vadd.f32 0.0, %v1182
        %1184 = vdwg.mxu0
        %1185 = vmatprep.subr.mxu0 0.0
        %1186 = vmatpush1.msra.mxu0 %v1106
        %1187 = vmatprep.subr.mxu0 0.0
        %1188 = vmatpush1.msra.mxu0 0.0
        %1189 = vmatprep.subr.mxu0 0.0
        %1190 = vmatpush1.msra.mxu0 0.0
        %1191 = vmatprep.subr.mxu0 0.0
        %1192 = vmatpush1.msra.mxu0 0.0
        %1193 = vmatprep.subr.mxu0 0.0
        %1194 = vmatpush1.msra.mxu0 0.0
        %1195 = vmatprep.subr.mxu0 0.0
        %1196 = vmatpush1.msra.mxu0 0.0
        %1197 = vmatprep.subr.mxu0 0.0
        %1198 = vmatpush1.msra.mxu0 0.0
        %1199 = vmatprep.subr.mxu0 0.0
        %1200 = vmatpush1.msra.mxu0 0.0
        %1201 = vmatprep.subr.mxu0 0.0
        %1202 = vmatpush1.msra.mxu0 0.0
        %1203 = vmatprep.subr.mxu0 0.0
        %1204 = vmatpush1.msra.mxu0 0.0
        %1205 = vmatprep.subr.mxu0 0.0
        %1206 = vmatpush1.msra.mxu0 0.0
        %1207 = vmatprep.subr.mxu0 0.0
        %1208 = vmatpush1.msra.mxu0 0.0
        %1209 = vmatprep.subr.mxu0 0.0
        %1210 = vmatpush1.msra.mxu0 0.0
        %1211 = vmatprep.subr.mxu0 0.0
        %1212 = vmatpush1.msra.mxu0 0.0
        %1213 = vmatprep.subr.mxu0 0.0
        %1214 = vmatpush1.msra.mxu0 0.0
        %1215 = vmatprep.subr.mxu0 0.0
        %1216 = vmatpush1.msra.mxu0 0.0
        %1217 = vmatprep.subr.mxu0 0.0
        %1218 = vmatpush1.msra.mxu0 0.0
        %1219 = vmatprep.subr.mxu0 0.0
        %1220 = vmatpush1.msra.mxu0 0.0
        %1221 = vmatprep.subr.mxu0 0.0
        %1222 = vmatpush1.msra.mxu0 0.0
        %1223 = vmatprep.subr.mxu0 0.0
        %1224 = vmatpush1.msra.mxu0 0.0
        %1225 = vmatprep.subr.mxu0 0.0
        %1226 = vmatpush1.msra.mxu0 0.0
        %1227 = vmatprep.subr.mxu0 0.0
        %1228 = vmatpush1.msra.mxu0 0.0
        %1229 = vmatprep.subr.mxu0 0.0
        %1230 = vmatpush1.msra.mxu0 0.0
        %1231 = vmatprep.subr.mxu0 0.0
        %1232 = vmatpush1.msra.mxu0 0.0
        %1233 = vmatprep.subr.mxu0 0.0
        %1234 = vmatpush1.msra.mxu0 0.0
        %1235 = vmatprep.subr.mxu0 0.0
        %1236 = vmatpush1.msra.mxu0 0.0
        %1237 = vmatprep.subr.mxu0 0.0
        %1238 = vmatpush1.msra.mxu0 0.0
        %1239 = vmatprep.subr.mxu0 0.0
        %1240 = vmatpush1.msra.mxu0 0.0
        %1241 = vmatprep.subr.mxu0 0.0
        %1242 = vmatpush1.msra.mxu0 0.0
        %1243 = vmatprep.subr.mxu0 0.0
        %1244 = vmatpush1.msra.mxu0 0.0
        %1245 = vmatprep.subr.mxu0 0.0
        %1246 = vmatpush1.msra.mxu0 0.0
        %1247 = vmatprep.subr.mxu0 0.0
        %1248 = vmatpush1.msra.mxu0 0.0
        %1249 = vmatprep.mubr.f32.mxu0 0.0
        %1250 = vmatmul.mubr.f32.gmra.mrb[0].mxu0 %v1097
        %v1251 = vpop.f32.mrb[0].mxu0
        %v1252 = vadd.f32 0.0, %v1251
        %v1253 = vpop.f32.mrb[0].mxu0
        %1254 = vmatprep.mubr.f32.mxu0 0.0
        %1255 = vmatmul.mubr.f32.gmra.mrb[0].mxu0 %v1100
        %v1256 = vpop.f32.mrb[0].mxu0
        %v1257 = vadd.f32 0.0, %v1256
        %v1258 = vpop.f32.mrb[0].mxu0
        %1259 = vdwg.mxu0
        %v1260 = vadd.f32 %v1073, %v1175
        %v1261 = vadd.f32 %v1074, %v1177
        %v1262 = vadd.f32 %v1075, %v1252
        %v1263 = vadd.f32 %v1076, %v1181
        %v1264 = vadd.f32 %v1077, %v1183
        %v1265 = vadd.f32 %v1078, %v1257
        %v1266 = vld [vmem:[%s168] sm:$0xff]
        %v1267 = vld [vmem:[%s168 + $0x8] sm:$0xf]
        %s1268 = scalar_lea.vmem %s0, 96
        %v1269 = vld [vmem:[%s1268] sm:$0xff]
        %v1270 = vld [vmem:[%s1268 + $0x8] sm:$0xff]
        %v1273 = vcombine.high %v1266, %v1266
        %1274 = vrot.lane.b32.xlu0 %v1266, 92
        %v1275 = vpop.permute.xlu0 %1274
        %1276 = vrot.lane.b32.xlu0 %v1273, 92
        %v1277 = vpop.permute.xlu0 %1276
        %1278 = vrot.lane.b32.xlu0 %v1267, 92
        %v1279 = vpop.permute.xlu0 %1278
        %vm1280 = vcmask 752640
        %v1281 = vsel %vm1280, %v1275, %v1277
        %v1282 = vsel %vm1280, %v1277, %v1279
        %v1284 = vsel %vm188, %v1269, 0
        %v1287 = vsel %vm188, %v1270, 0
        %v1289 = vsel %vm195, %v1281, 0
        %v1291 = vsel %vm195, %v1282, 0
        %v1293 = vsel %vm195, %v1279, 0
        %1295 = vmatprep.subr.mxu0 %v1291
        %1296 = vmatpush1.msra.mxu0 %v1289
        %1297 = vmatprep.subr.mxu0 0.0
        %1298 = vmatpush1.msra.mxu0 0.0
        %1299 = vmatprep.subr.mxu0 0.0
        %1300 = vmatpush1.msra.mxu0 0.0
        %1301 = vmatprep.subr.mxu0 0.0
        %1302 = vmatpush1.msra.mxu0 0.0
        %1303 = vmatprep.subr.mxu0 0.0
        %1304 = vmatpush1.msra.mxu0 0.0
        %1305 = vmatprep.subr.mxu0 0.0
        %1306 = vmatpush1.msra.mxu0 0.0
        %1307 = vmatprep.subr.mxu0 0.0
        %1308 = vmatpush1.msra.mxu0 0.0
        %1309 = vmatprep.subr.mxu0 0.0
        %1310 = vmatpush1.msra.mxu0 0.0
        %1311 = vmatprep.subr.mxu0 0.0
        %1312 = vmatpush1.msra.mxu0 0.0
        %1313 = vmatprep.subr.mxu0 0.0
        %1314 = vmatpush1.msra.mxu0 0.0
        %1315 = vmatprep.subr.mxu0 0.0
        %1316 = vmatpush1.msra.mxu0 0.0
        %1317 = vmatprep.subr.mxu0 0.0
        %1318 = vmatpush1.msra.mxu0 0.0
        %1319 = vmatprep.subr.mxu0 0.0
        %1320 = vmatpush1.msra.mxu0 0.0
        %1321 = vmatprep.subr.mxu0 0.0
        %1322 = vmatpush1.msra.mxu0 0.0
        %1323 = vmatprep.subr.mxu0 0.0
        %1324 = vmatpush1.msra.mxu0 0.0
        %1325 = vmatprep.subr.mxu0 0.0
        %1326 = vmatpush1.msra.mxu0 0.0
        %1327 = vmatprep.subr.mxu0 0.0
        %1328 = vmatpush1.msra.mxu0 0.0
        %1329 = vmatprep.subr.mxu0 0.0
        %1330 = vmatpush1.msra.mxu0 0.0
        %1331 = vmatprep.subr.mxu0 0.0
        %1332 = vmatpush1.msra.mxu0 0.0
        %1333 = vmatprep.subr.mxu0 0.0
        %1334 = vmatpush1.msra.mxu0 0.0
        %1335 = vmatprep.subr.mxu0 0.0
        %1336 = vmatpush1.msra.mxu0 0.0
        %1337 = vmatprep.subr.mxu0 0.0
        %1338 = vmatpush1.msra.mxu0 0.0
        %1339 = vmatprep.subr.mxu0 0.0
        %1340 = vmatpush1.msra.mxu0 0.0
        %1341 = vmatprep.subr.mxu0 0.0
        %1342 = vmatpush1.msra.mxu0 0.0
        %1343 = vmatprep.subr.mxu0 0.0
        %1344 = vmatpush1.msra.mxu0 0.0
        %1345 = vmatprep.subr.mxu0 0.0
        %1346 = vmatpush1.msra.mxu0 0.0
        %1347 = vmatprep.subr.mxu0 0.0
        %1348 = vmatpush1.msra.mxu0 0.0
        %1349 = vmatprep.subr.mxu0 0.0
        %1350 = vmatpush1.msra.mxu0 0.0
        %1351 = vmatprep.subr.mxu0 0.0
        %1352 = vmatpush1.msra.mxu0 0.0
        %1353 = vmatprep.subr.mxu0 0.0
        %1354 = vmatpush1.msra.mxu0 0.0
        %1355 = vmatprep.subr.mxu0 0.0
        %1356 = vmatpush1.msra.mxu0 0.0
        %1357 = vmatprep.subr.mxu0 0.0
        %1358 = vmatpush1.msra.mxu0 0.0
        %1359 = vmatprep.mubr.f32.mxu0 0.0
        %1360 = vmatmul.mubr.f32.gmra.mrb[0].mxu0 %v1284
        %v1361 = vpop.f32.mrb[0].mxu0
        %v1362 = vadd.f32 0.0, %v1361
        %v1363 = vpop.f32.mrb[0].mxu0
        %v1364 = vadd.f32 0.0, %v1363
        %1365 = vmatprep.mubr.f32.mxu0 0.0
        %1366 = vmatmul.mubr.f32.gmra.mrb[0].mxu0 %v1287
        %v1367 = vpop.f32.mrb[0].mxu0
        %v1368 = vadd.f32 0.0, %v1367
        %v1369 = vpop.f32.mrb[0].mxu0
        %v1370 = vadd.f32 0.0, %v1369
        %1371 = vdwg.mxu0
        %1372 = vmatprep.subr.mxu0 0.0
        %1373 = vmatpush1.msra.mxu0 %v1293
        %1374 = vmatprep.subr.mxu0 0.0
        %1375 = vmatpush1.msra.mxu0 0.0
        %1376 = vmatprep.subr.mxu0 0.0
        %1377 = vmatpush1.msra.mxu0 0.0
        %1378 = vmatprep.subr.mxu0 0.0
        %1379 = vmatpush1.msra.mxu0 0.0
        %1380 = vmatprep.subr.mxu0 0.0
        %1381 = vmatpush1.msra.mxu0 0.0
        %1382 = vmatprep.subr.mxu0 0.0
        %1383 = vmatpush1.msra.mxu0 0.0
        %1384 = vmatprep.subr.mxu0 0.0
        %1385 = vmatpush1.msra.mxu0 0.0
        %1386 = vmatprep.subr.mxu0 0.0
        %1387 = vmatpush1.msra.mxu0 0.0
        %1388 = vmatprep.subr.mxu0 0.0
        %1389 = vmatpush1.msra.mxu0 0.0
        %1390 = vmatprep.subr.mxu0 0.0
        %1391 = vmatpush1.msra.mxu0 0.0
        %1392 = vmatprep.subr.mxu0 0.0
        %1393 = vmatpush1.msra.mxu0 0.0
        %1394 = vmatprep.subr.mxu0 0.0
        %1395 = vmatpush1.msra.mxu0 0.0
        %1396 = vmatprep.subr.mxu0 0.0
        %1397 = vmatpush1.msra.mxu0 0.0
        %1398 = vmatprep.subr.mxu0 0.0
        %1399 = vmatpush1.msra.mxu0 0.0
        %1400 = vmatprep.subr.mxu0 0.0
        %1401 = vmatpush1.msra.mxu0 0.0
        %1402 = vmatprep.subr.mxu0 0.0
        %1403 = vmatpush1.msra.mxu0 0.0
        %1404 = vmatprep.subr.mxu0 0.0
        %1405 = vmatpush1.msra.mxu0 0.0
        %1406 = vmatprep.subr.mxu0 0.0
        %1407 = vmatpush1.msra.mxu0 0.0
        %1408 = vmatprep.subr.mxu0 0.0
        %1409 = vmatpush1.msra.mxu0 0.0
        %1410 = vmatprep.subr.mxu0 0.0
        %1411 = vmatpush1.msra.mxu0 0.0
        %1412 = vmatprep.subr.mxu0 0.0
        %1413 = vmatpush1.msra.mxu0 0.0
        %1414 = vmatprep.subr.mxu0 0.0
        %1415 = vmatpush1.msra.mxu0 0.0
        %1416 = vmatprep.subr.mxu0 0.0
        %1417 = vmatpush1.msra.mxu0 0.0
        %1418 = vmatprep.subr.mxu0 0.0
        %1419 = vmatpush1.msra.mxu0 0.0
        %1420 = vmatprep.subr.mxu0 0.0
        %1421 = vmatpush1.msra.mxu0 0.0
        %1422 = vmatprep.subr.mxu0 0.0
        %1423 = vmatpush1.msra.mxu0 0.0
        %1424 = vmatprep.subr.mxu0 0.0
        %1425 = vmatpush1.msra.mxu0 0.0
        %1426 = vmatprep.subr.mxu0 0.0
        %1427 = vmatpush1.msra.mxu0 0.0
        %1428 = vmatprep.subr.mxu0 0.0
        %1429 = vmatpush1.msra.mxu0 0.0
        %1430 = vmatprep.subr.mxu0 0.0
        %1431 = vmatpush1.msra.mxu0 0.0
        %1432 = vmatprep.subr.mxu0 0.0
        %1433 = vmatpush1.msra.mxu0 0.0
        %1434 = vmatprep.subr.mxu0 0.0
        %1435 = vmatpush1.msra.mxu0 0.0
        %1436 = vmatprep.mubr.f32.mxu0 0.0
        %1437 = vmatmul.mubr.f32.gmra.mrb[0].mxu0 %v1284
        %v1438 = vpop.f32.mrb[0].mxu0
        %v1439 = vadd.f32 0.0, %v1438
        %v1440 = vpop.f32.mrb[0].mxu0
        %1441 = vmatprep.mubr.f32.mxu0 0.0
        %1442 = vmatmul.mubr.f32.gmra.mrb[0].mxu0 %v1287
        %v1443 = vpop.f32.mrb[0].mxu0
        %v1444 = vadd.f32 0.0, %v1443
        %v1445 = vpop.f32.mrb[0].mxu0
        %1446 = vdwg.mxu0
        %v1447 = vadd.f32 %v1260, %v1362
        %v1448 = vadd.f32 %v1261, %v1364
        %v1449 = vadd.f32 %v1262, %v1439
        %v1450 = vadd.f32 %v1263, %v1368
        %v1451 = vadd.f32 %v1264, %v1370
        %v1452 = vadd.f32 %v1265, %v1444
        %v1453 = vld [vmem:[%s168] sm:$0xff]
        %v1454 = vld [vmem:[%s168 + $0x8] sm:$0xf]
        %s1455 = scalar_lea.vmem %s0, 112
        %v1456 = vld [vmem:[%s1455] sm:$0xff]
        %v1457 = vld [vmem:[%s1455 + $0x8] sm:$0xff]
        %v1460 = vcombine.high %v1453, %v1453
        %1461 = vrot.lane.b32.xlu0 %v1453, 91
        %v1462 = vpop.permute.xlu0 %1461
        %1463 = vrot.lane.b32.xlu0 %v1460, 91
        %v1464 = vpop.permute.xlu0 %1463
        %1465 = vrot.lane.b32.xlu0 %v1454, 91
        %v1466 = vpop.permute.xlu0 %1465
        %vm1467 = vcmask 744448
        %v1468 = vsel %vm1467, %v1462, %v1464
        %v1469 = vsel %vm1467, %v1464, %v1466
        %v1471 = vsel %vm188, %v1456, 0
        %v1474 = vsel %vm188, %v1457, 0
        %v1476 = vsel %vm195, %v1468, 0
        %v1478 = vsel %vm195, %v1469, 0
        %v1480 = vsel %vm195, %v1466, 0
        %1482 = vmatprep.subr.mxu0 %v1478
        %1483 = vmatpush1.msra.mxu0 %v1476
        %1484 = vmatprep.subr.mxu0 0.0
        %1485 = vmatpush1.msra.mxu0 0.0
        %1486 = vmatprep.subr.mxu0 0.0
        %1487 = vmatpush1.msra.mxu0 0.0
        %1488 = vmatprep.subr.mxu0 0.0
        %1489 = vmatpush1.msra.mxu0 0.0
        %1490 = vmatprep.subr.mxu0 0.0
        %1491 = vmatpush1.msra.mxu0 0.0
        %1492 = vmatprep.subr.mxu0 0.0
        %1493 = vmatpush1.msra.mxu0 0.0
        %1494 = vmatprep.subr.mxu0 0.0
        %1495 = vmatpush1.msra.mxu0 0.0
        %1496 = vmatprep.subr.mxu0 0.0
        %1497 = vmatpush1.msra.mxu0 0.0
        %1498 = vmatprep.subr.mxu0 0.0
        %1499 = vmatpush1.msra.mxu0 0.0
        %1500 = vmatprep.subr.mxu0 0.0
        %1501 = vmatpush1.msra.mxu0 0.0
        %1502 = vmatprep.subr.mxu0 0.0
        %1503 = vmatpush1.msra.mxu0 0.0
        %1504 = vmatprep.subr.mxu0 0.0
        %1505 = vmatpush1.msra.mxu0 0.0
        %1506 = vmatprep.subr.mxu0 0.0
        %1507 = vmatpush1.msra.mxu0 0.0
        %1508 = vmatprep.subr.mxu0 0.0
        %1509 = vmatpush1.msra.mxu0 0.0
        %1510 = vmatprep.subr.mxu0 0.0
        %1511 = vmatpush1.msra.mxu0 0.0
        %1512 = vmatprep.subr.mxu0 0.0
        %1513 = vmatpush1.msra.mxu0 0.0
        %1514 = vmatprep.subr.mxu0 0.0
        %1515 = vmatpush1.msra.mxu0 0.0
        %1516 = vmatprep.subr.mxu0 0.0
        %1517 = vmatpush1.msra.mxu0 0.0
        %1518 = vmatprep.subr.mxu0 0.0
        %1519 = vmatpush1.msra.mxu0 0.0
        %1520 = vmatprep.subr.mxu0 0.0
        %1521 = vmatpush1.msra.mxu0 0.0
        %1522 = vmatprep.subr.mxu0 0.0
        %1523 = vmatpush1.msra.mxu0 0.0
        %1524 = vmatprep.subr.mxu0 0.0
        %1525 = vmatpush1.msra.mxu0 0.0
        %1526 = vmatprep.subr.mxu0 0.0
        %1527 = vmatpush1.msra.mxu0 0.0
        %1528 = vmatprep.subr.mxu0 0.0
        %1529 = vmatpush1.msra.mxu0 0.0
        %1530 = vmatprep.subr.mxu0 0.0
        %1531 = vmatpush1.msra.mxu0 0.0
        %1532 = vmatprep.subr.mxu0 0.0
        %1533 = vmatpush1.msra.mxu0 0.0
        %1534 = vmatprep.subr.mxu0 0.0
        %1535 = vmatpush1.msra.mxu0 0.0
        %1536 = vmatprep.subr.mxu0 0.0
        %1537 = vmatpush1.msra.mxu0 0.0
        %1538 = vmatprep.subr.mxu0 0.0
        %1539 = vmatpush1.msra.mxu0 0.0
        %1540 = vmatprep.subr.mxu0 0.0
        %1541 = vmatpush1.msra.mxu0 0.0
        %1542 = vmatprep.subr.mxu0 0.0
        %1543 = vmatpush1.msra.mxu0 0.0
        %1544 = vmatprep.subr.mxu0 0.0
        %1545 = vmatpush1.msra.mxu0 0.0
        %1546 = vmatprep.mubr.f32.mxu0 0.0
        %1547 = vmatmul.mubr.f32.gmra.mrb[0].mxu0 %v1471
        %v1548 = vpop.f32.mrb[0].mxu0
        %v1549 = vadd.f32 0.0, %v1548
        %v1550 = vpop.f32.mrb[0].mxu0
        %v1551 = vadd.f32 0.0, %v1550
        %1552 = vmatprep.mubr.f32.mxu0 0.0
        %1553 = vmatmul.mubr.f32.gmra.mrb[0].mxu0 %v1474
        %v1554 = vpop.f32.mrb[0].mxu0
        %v1555 = vadd.f32 0.0, %v1554
        %v1556 = vpop.f32.mrb[0].mxu0
        %v1557 = vadd.f32 0.0, %v1556
        %1558 = vdwg.mxu0
        %1559 = vmatprep.subr.mxu0 0.0
        %1560 = vmatpush1.msra.mxu0 %v1480
        %1561 = vmatprep.subr.mxu0 0.0
        %1562 = vmatpush1.msra.mxu0 0.0
        %1563 = vmatprep.subr.mxu0 0.0
        %1564 = vmatpush1.msra.mxu0 0.0
        %1565 = vmatprep.subr.mxu0 0.0
        %1566 = vmatpush1.msra.mxu0 0.0
        %1567 = vmatprep.subr.mxu0 0.0
        %1568 = vmatpush1.msra.mxu0 0.0
        %1569 = vmatprep.subr.mxu0 0.0
        %1570 = vmatpush1.msra.mxu0 0.0
        %1571 = vmatprep.subr.mxu0 0.0
        %1572 = vmatpush1.msra.mxu0 0.0
        %1573 = vmatprep.subr.mxu0 0.0
        %1574 = vmatpush1.msra.mxu0 0.0
        %1575 = vmatprep.subr.mxu0 0.0
        %1576 = vmatpush1.msra.mxu0 0.0
        %1577 = vmatprep.subr.mxu0 0.0
        %1578 = vmatpush1.msra.mxu0 0.0
        %1579 = vmatprep.subr.mxu0 0.0
        %1580 = vmatpush1.msra.mxu0 0.0
        %1581 = vmatprep.subr.mxu0 0.0
        %1582 = vmatpush1.msra.mxu0 0.0
        %1583 = vmatprep.subr.mxu0 0.0
        %1584 = vmatpush1.msra.mxu0 0.0
        %1585 = vmatprep.subr.mxu0 0.0
        %1586 = vmatpush1.msra.mxu0 0.0
        %1587 = vmatprep.subr.mxu0 0.0
        %1588 = vmatpush1.msra.mxu0 0.0
        %1589 = vmatprep.subr.mxu0 0.0
        %1590 = vmatpush1.msra.mxu0 0.0
        %1591 = vmatprep.subr.mxu0 0.0
        %1592 = vmatpush1.msra.mxu0 0.0
        %1593 = vmatprep.subr.mxu0 0.0
        %1594 = vmatpush1.msra.mxu0 0.0
        %1595 = vmatprep.subr.mxu0 0.0
        %1596 = vmatpush1.msra.mxu0 0.0
        %1597 = vmatprep.subr.mxu0 0.0
        %1598 = vmatpush1.msra.mxu0 0.0
        %1599 = vmatprep.subr.mxu0 0.0
        %1600 = vmatpush1.msra.mxu0 0.0
        %1601 = vmatprep.subr.mxu0 0.0
        %1602 = vmatpush1.msra.mxu0 0.0
        %1603 = vmatprep.subr.mxu0 0.0
        %1604 = vmatpush1.msra.mxu0 0.0
        %1605 = vmatprep.subr.mxu0 0.0
        %1606 = vmatpush1.msra.mxu0 0.0
        %1607 = vmatprep.subr.mxu0 0.0
        %1608 = vmatpush1.msra.mxu0 0.0
        %1609 = vmatprep.subr.mxu0 0.0
        %1610 = vmatpush1.msra.mxu0 0.0
        %1611 = vmatprep.subr.mxu0 0.0
        %1612 = vmatpush1.msra.mxu0 0.0
        %1613 = vmatprep.subr.mxu0 0.0
        %1614 = vmatpush1.msra.mxu0 0.0
        %1615 = vmatprep.subr.mxu0 0.0
        %1616 = vmatpush1.msra.mxu0 0.0
        %1617 = vmatprep.subr.mxu0 0.0
        %1618 = vmatpush1.msra.mxu0 0.0
        %1619 = vmatprep.subr.mxu0 0.0
        %1620 = vmatpush1.msra.mxu0 0.0
        %1621 = vmatprep.subr.mxu0 0.0
        %1622 = vmatpush1.msra.mxu0 0.0
        %1623 = vmatprep.mubr.f32.mxu0 0.0
        %1624 = vmatmul.mubr.f32.gmra.mrb[0].mxu0 %v1471
        %v1625 = vpop.f32.mrb[0].mxu0
        %v1626 = vadd.f32 0.0, %v1625
        %v1627 = vpop.f32.mrb[0].mxu0
        %1628 = vmatprep.mubr.f32.mxu0 0.0
        %1629 = vmatmul.mubr.f32.gmra.mrb[0].mxu0 %v1474
        %v1630 = vpop.f32.mrb[0].mxu0
        %v1631 = vadd.f32 0.0, %v1630
        %v1632 = vpop.f32.mrb[0].mxu0
        %1633 = vdwg.mxu0
        %v1634 = vadd.f32 %v1447, %v1549
        %v1635 = vadd.f32 %v1448, %v1551
        %v1636 = vadd.f32 %v1449, %v1626
        %v1637 = vadd.f32 %v1450, %v1555
        %v1638 = vadd.f32 %v1451, %v1557
        %v1639 = vadd.f32 %v1452, %v1631
        %v1640 = vld [vmem:[%s168] sm:$0xff]
        %v1641 = vld [vmem:[%s168 + $0x8] sm:$0xf]
        %s1642 = scalar_lea.vmem %s0, 128
        %v1643 = vld [vmem:[%s1642] sm:$0xff]
        %v1644 = vld [vmem:[%s1642 + $0x8] sm:$0xff]
        %v1647 = vcombine.high %v1640, %v1640
        %1648 = vrot.lane.b32.xlu0 %v1640, 90
        %v1649 = vpop.permute.xlu0 %1648
        %1650 = vrot.lane.b32.xlu0 %v1647, 90
        %v1651 = vpop.permute.xlu0 %1650
        %1652 = vrot.lane.b32.xlu0 %v1641, 90
        %v1653 = vpop.permute.xlu0 %1652
        %vm1654 = vcmask 736256
        %v1655 = vsel %vm1654, %v1649, %v1651
        %v1656 = vsel %vm1654, %v1651, %v1653
        %v1658 = vsel %vm188, %v1643, 0
        %v1661 = vsel %vm188, %v1644, 0
        %v1663 = vsel %vm195, %v1655, 0
        %v1665 = vsel %vm195, %v1656, 0
        %v1667 = vsel %vm195, %v1653, 0
        %1669 = vmatprep.subr.mxu0 %v1665
        %1670 = vmatpush1.msra.mxu0 %v1663
        %1671 = vmatprep.subr.mxu0 0.0
        %1672 = vmatpush1.msra.mxu0 0.0
        %1673 = vmatprep.subr.mxu0 0.0
        %1674 = vmatpush1.msra.mxu0 0.0
        %1675 = vmatprep.subr.mxu0 0.0
        %1676 = vmatpush1.msra.mxu0 0.0
        %1677 = vmatprep.subr.mxu0 0.0
        %1678 = vmatpush1.msra.mxu0 0.0
        %1679 = vmatprep.subr.mxu0 0.0
        %1680 = vmatpush1.msra.mxu0 0.0
        %1681 = vmatprep.subr.mxu0 0.0
        %1682 = vmatpush1.msra.mxu0 0.0
        %1683 = vmatprep.subr.mxu0 0.0
        %1684 = vmatpush1.msra.mxu0 0.0
        %1685 = vmatprep.subr.mxu0 0.0
        %1686 = vmatpush1.msra.mxu0 0.0
        %1687 = vmatprep.subr.mxu0 0.0
        %1688 = vmatpush1.msra.mxu0 0.0
        %1689 = vmatprep.subr.mxu0 0.0
        %1690 = vmatpush1.msra.mxu0 0.0
        %1691 = vmatprep.subr.mxu0 0.0
        %1692 = vmatpush1.msra.mxu0 0.0
        %1693 = vmatprep.subr.mxu0 0.0
        %1694 = vmatpush1.msra.mxu0 0.0
        %1695 = vmatprep.subr.mxu0 0.0
        %1696 = vmatpush1.msra.mxu0 0.0
        %1697 = vmatprep.subr.mxu0 0.0
        %1698 = vmatpush1.msra.mxu0 0.0
        %1699 = vmatprep.subr.mxu0 0.0
        %1700 = vmatpush1.msra.mxu0 0.0
        %1701 = vmatprep.subr.mxu0 0.0
        %1702 = vmatpush1.msra.mxu0 0.0
        %1703 = vmatprep.subr.mxu0 0.0
        %1704 = vmatpush1.msra.mxu0 0.0
        %1705 = vmatprep.subr.mxu0 0.0
        %1706 = vmatpush1.msra.mxu0 0.0
        %1707 = vmatprep.subr.mxu0 0.0
        %1708 = vmatpush1.msra.mxu0 0.0
        %1709 = vmatprep.subr.mxu0 0.0
        %1710 = vmatpush1.msra.mxu0 0.0
        %1711 = vmatprep.subr.mxu0 0.0
        %1712 = vmatpush1.msra.mxu0 0.0
        %1713 = vmatprep.subr.mxu0 0.0
        %1714 = vmatpush1.msra.mxu0 0.0
        %1715 = vmatprep.subr.mxu0 0.0
        %1716 = vmatpush1.msra.mxu0 0.0
        %1717 = vmatprep.subr.mxu0 0.0
        %1718 = vmatpush1.msra.mxu0 0.0
        %1719 = vmatprep.subr.mxu0 0.0
        %1720 = vmatpush1.msra.mxu0 0.0
        %1721 = vmatprep.subr.mxu0 0.0
        %1722 = vmatpush1.msra.mxu0 0.0
        %1723 = vmatprep.subr.mxu0 0.0
        %1724 = vmatpush1.msra.mxu0 0.0
        %1725 = vmatprep.subr.mxu0 0.0
        %1726 = vmatpush1.msra.mxu0 0.0
        %1727 = vmatprep.subr.mxu0 0.0
        %1728 = vmatpush1.msra.mxu0 0.0
        %1729 = vmatprep.subr.mxu0 0.0
        %1730 = vmatpush1.msra.mxu0 0.0
        %1731 = vmatprep.subr.mxu0 0.0
        %1732 = vmatpush1.msra.mxu0 0.0
        %1733 = vmatprep.mubr.f32.mxu0 0.0
        %1734 = vmatmul.mubr.f32.gmra.mrb[0].mxu0 %v1658
        %v1735 = vpop.f32.mrb[0].mxu0
        %v1736 = vadd.f32 0.0, %v1735
        %v1737 = vpop.f32.mrb[0].mxu0
        %v1738 = vadd.f32 0.0, %v1737
        %1739 = vmatprep.mubr.f32.mxu0 0.0
        %1740 = vmatmul.mubr.f32.gmra.mrb[0].mxu0 %v1661
        %v1741 = vpop.f32.mrb[0].mxu0
        %v1742 = vadd.f32 0.0, %v1741
        %v1743 = vpop.f32.mrb[0].mxu0
        %v1744 = vadd.f32 0.0, %v1743
        %1745 = vdwg.mxu0
        %1746 = vmatprep.subr.mxu0 0.0
        %1747 = vmatpush1.msra.mxu0 %v1667
        %1748 = vmatprep.subr.mxu0 0.0
        %1749 = vmatpush1.msra.mxu0 0.0
        %1750 = vmatprep.subr.mxu0 0.0
        %1751 = vmatpush1.msra.mxu0 0.0
        %1752 = vmatprep.subr.mxu0 0.0
        %1753 = vmatpush1.msra.mxu0 0.0
        %1754 = vmatprep.subr.mxu0 0.0
        %1755 = vmatpush1.msra.mxu0 0.0
        %1756 = vmatprep.subr.mxu0 0.0
        %1757 = vmatpush1.msra.mxu0 0.0
        %1758 = vmatprep.subr.mxu0 0.0
        %1759 = vmatpush1.msra.mxu0 0.0
        %1760 = vmatprep.subr.mxu0 0.0
        %1761 = vmatpush1.msra.mxu0 0.0
        %1762 = vmatprep.subr.mxu0 0.0
        %1763 = vmatpush1.msra.mxu0 0.0
        %1764 = vmatprep.subr.mxu0 0.0
        %1765 = vmatpush1.msra.mxu0 0.0
        %1766 = vmatprep.subr.mxu0 0.0
        %1767 = vmatpush1.msra.mxu0 0.0
        %1768 = vmatprep.subr.mxu0 0.0
        %1769 = vmatpush1.msra.mxu0 0.0
        %1770 = vmatprep.subr.mxu0 0.0
        %1771 = vmatpush1.msra.mxu0 0.0
        %1772 = vmatprep.subr.mxu0 0.0
        %1773 = vmatpush1.msra.mxu0 0.0
        %1774 = vmatprep.subr.mxu0 0.0
        %1775 = vmatpush1.msra.mxu0 0.0
        %1776 = vmatprep.subr.mxu0 0.0
        %1777 = vmatpush1.msra.mxu0 0.0
        %1778 = vmatprep.subr.mxu0 0.0
        %1779 = vmatpush1.msra.mxu0 0.0
        %1780 = vmatprep.subr.mxu0 0.0
        %1781 = vmatpush1.msra.mxu0 0.0
        %1782 = vmatprep.subr.mxu0 0.0
        %1783 = vmatpush1.msra.mxu0 0.0
        %1784 = vmatprep.subr.mxu0 0.0
        %1785 = vmatpush1.msra.mxu0 0.0
        %1786 = vmatprep.subr.mxu0 0.0
        %1787 = vmatpush1.msra.mxu0 0.0
        %1788 = vmatprep.subr.mxu0 0.0
        %1789 = vmatpush1.msra.mxu0 0.0
        %1790 = vmatprep.subr.mxu0 0.0
        %1791 = vmatpush1.msra.mxu0 0.0
        %1792 = vmatprep.subr.mxu0 0.0
        %1793 = vmatpush1.msra.mxu0 0.0
        %1794 = vmatprep.subr.mxu0 0.0
        %1795 = vmatpush1.msra.mxu0 0.0
        %1796 = vmatprep.subr.mxu0 0.0
        %1797 = vmatpush1.msra.mxu0 0.0
        %1798 = vmatprep.subr.mxu0 0.0
        %1799 = vmatpush1.msra.mxu0 0.0
        %1800 = vmatprep.subr.mxu0 0.0
        %1801 = vmatpush1.msra.mxu0 0.0
        %1802 = vmatprep.subr.mxu0 0.0
        %1803 = vmatpush1.msra.mxu0 0.0
        %1804 = vmatprep.subr.mxu0 0.0
        %1805 = vmatpush1.msra.mxu0 0.0
        %1806 = vmatprep.subr.mxu0 0.0
        %1807 = vmatpush1.msra.mxu0 0.0
        %1808 = vmatprep.subr.mxu0 0.0
        %1809 = vmatpush1.msra.mxu0 0.0
        %1810 = vmatprep.mubr.f32.mxu0 0.0
        %1811 = vmatmul.mubr.f32.gmra.mrb[0].mxu0 %v1658
        %v1812 = vpop.f32.mrb[0].mxu0
        %v1813 = vadd.f32 0.0, %v1812
        %v1814 = vpop.f32.mrb[0].mxu0
        %1815 = vmatprep.mubr.f32.mxu0 0.0
        %1816 = vmatmul.mubr.f32.gmra.mrb[0].mxu0 %v1661
        %v1817 = vpop.f32.mrb[0].mxu0
        %v1818 = vadd.f32 0.0, %v1817
        %v1819 = vpop.f32.mrb[0].mxu0
        %1820 = vdwg.mxu0
        %v1821 = vadd.f32 %v1634, %v1736
        %v1822 = vadd.f32 %v1635, %v1738
        %v1823 = vadd.f32 %v1636, %v1813
        %v1824 = vadd.f32 %v1637, %v1742
        %v1825 = vadd.f32 %v1638, %v1744
        %v1826 = vadd.f32 %v1639, %v1818
        %v1827 = vld [vmem:[%s1] sm:$0xff]
        %v1828 = vld [vmem:[%s1 + $0x8] sm:$0xff]
        %1830 = vset.pattern.permute.xlu0 0
        %1831 = vperm.xlu0 %1830, %v1827
        %v1832 = vpop.permute.xlu0 %1831
        %1835 = vset.pattern.permute.xlu0 0
        %1836 = vperm.xlu0 %1835, %v1828
        %v1837 = vpop.permute.xlu0 %1836
        %v1839 = vadd.f32 %v1821, %v1832
        %v1840 = vadd.f32 %v1822, %v1832
        %v1841 = vadd.f32 %v1823, %v1832
        %v1842 = vadd.f32 %v1824, %v1837
        %v1843 = vadd.f32 %v1825, %v1837
        %v1844 = vadd.f32 %v1826, %v1837
        %v1845 = vmul.f32 %v1839, 0.5
        %v1846 = vmul.f32 %v1840, 0.5
        %v1847 = vmul.f32 %v1841, 0.5
        %v1848 = vmul.f32 %v1842, 0.5
        %v1849 = vmul.f32 %v1843, 0.5
        %v1850 = vmul.f32 %v1844, 0.5
        %v1851 = vmul.f32 %v1839, 0.70710677
        %v1852 = vmul.f32 %v1840, 0.70710677
        %v1853 = vmul.f32 %v1841, 0.70710677
        %v1854 = vmul.f32 %v1842, 0.70710677
        %v1855 = vmul.f32 %v1843, 0.70710677
        %v1856 = vmul.f32 %v1844, 0.70710677
        %v1857 = verf.f32.pop %v1851
        %v1858 = verf.f32.pop %v1852
        %v1859 = verf.f32.pop %v1853
        %v1860 = verf.f32.pop %v1854
        %v1861 = verf.f32.pop %v1855
        %v1862 = verf.f32.pop %v1856
        %v1863 = vadd.f32 %v1857, 1.0
        %v1864 = vadd.f32 %v1858, 1.0
        %v1865 = vadd.f32 %v1859, 1.0
        %v1866 = vadd.f32 %v1860, 1.0
        %v1867 = vadd.f32 %v1861, 1.0
        %v1868 = vadd.f32 %v1862, 1.0
        %v1869 = vmul.f32 %v1845, %v1863
        %v1870 = vmul.f32 %v1846, %v1864
        %v1871 = vmul.f32 %v1847, %v1865
        %v1872 = vmul.f32 %v1848, %v1866
        %v1873 = vmul.f32 %v1849, %v1867
        %v1874 = vmul.f32 %v1850, %v1868
        %1875 = vst [vmem:[%s163] sm:$0xff] %v1869
        %1876 = vst [vmem:[%s163 + $0x8] sm:$0xff] %v1870
        %vm1877 = vcmask 261120
        %1878 = vst.msk [vmem:[%s163 + $0x10] sm:$0xff] %vm1877, %v1871
        %1879 = vst [vmem:[%s163 + $0x18] sm:$0xff] %v1872
        %1880 = vst [vmem:[%s163 + $0x20] sm:$0xff] %v1873
        %1881 = vst.msk [vmem:[%s163 + $0x28] sm:$0xff] %vm1877, %v1874
        %s1882 = sand.u32 %s93, 1
        %s1883 = scalar_lea.sflag [#allocation3], %s1882
        %s1884 = sand.u32 %s93, 1
        %s1885 = smul.addr %s1884, 48
        %s1886 = scalar_lea.vmem [#allocation2], %s1885
        // Predicated region
        $region33: #{tpu_custom_call.1} parent=31 // pred_check
          %p1887 = pneg %p103
        $region34: #{tpu_custom_call.1} parent=31 // pred_check_branch
          %1889 = sbr.rel (%p1887) target = $region36
        $region35: #{tpu_custom_call.1} parent=31 // pred_region
          %s1891 = ssub.s32 768, 768
          %1892 = vsyncadd %s1883, %s1891
          %s1893 = smul.addr %s17, 6
          %s1894 = smul.addr %s1893, 128
          %s1895 = scalar_lea.hbm %s3, %s1894
          %s1896 = sshll.u32 %s1886, 4
          %s1897 = int_to_ptr.vmem [resolvable:$true] %s1896
          %1902 = dma.vmem_to_hbm [thread:$0]  %s1897, 768, %s1895, %s1883, 384, 384, 24
        $region36: #{tpu_custom_call.1} parent=31 // pred_fallthru
          _
      $region32: #{tpu_custom_call.1} parent=5 // pred_fallthru
        _
      %p1903 = scmp.le.s32.totalorder 2, %s12
      // Predicated region
      $region37: #{tpu_custom_call.1} parent=5 // pred_check
        %p1904 = pneg %p1903
      $region38: #{tpu_custom_call.1} parent=5 // pred_check_branch
        %1906 = sbr.rel (%p1904) target = $region40
      $region39: #{tpu_custom_call.1} parent=5 // pred_region
        %s1907 = ssub.s32 %s12, 2
        // Predicated region
        $region41: #{tpu_custom_call.1} parent=39 // pred_check
          %p1908 = pneg %p109
        $region42: #{tpu_custom_call.1} parent=39 // pred_check_branch
          %1910 = sbr.rel (%p1908) target = $region44
        $region43: #{tpu_custom_call.1} parent=39 // pred_region
          %s1911 = sand.u32 %s94, 1
          %s1912 = scalar_lea.sflag [#allocation3], %s1911
          %s1913 = sand.u32 %s94, 1
          %s1914 = smul.addr %s1913, 48
          %s1915 = scalar_lea.vmem [#allocation2], %s1914
          %1916 = dma.done %s1912, 768
        $region44: #{tpu_custom_call.1} parent=39 // pred_fallthru
          _
      $region40: #{tpu_custom_call.1} parent=5 // pred_fallthru
        _
    $region6: #{tpu_custom_call.1} parent=1 // loop_footer
      %s16 = sadd.s32 1, %s12
    $region7: #{tpu_custom_call.1} parent=1 // loop_footer_branch
      %11 = sbr.rel target = $region3
    $region8: #{tpu_custom_call.1} parent=1 // loop_exit
      _
    %1917 = vsyncpa [#allocation3], 1
    %s1918 = scalar_lea.sflag [#allocation3], 1
    %1919 = vsyncpa %s1918, 1

</llo_original>
